<compile_context>
chip_gen: v5e
topology: v5e:2x2
jax: 0.10.0
libtpu: 0.0.40
codegen_flags: <defaults>
</compile_context>

<pallas_src>
import functools

import jax
import jax.numpy as jnp
import numpy as np
from jax.experimental import pallas as pl
from jax.experimental.pallas import tpu as pltpu


# ------------------------- small helpers -------------------------

def _round_up(n, m):
    return ((n + m - 1) // m) * m


def _dot(a, b):
    return jnp.dot(a, b, preferred_element_type=jnp.float32)


def _dot_nt(a, b):  # a @ b.T without materializing a transpose
    return jax.lax.dot_general(a, b, (((1,), (1,)), ((), ())),
                               preferred_element_type=jnp.float32)


def _ffn(z, w_ref, b_ref):
    # Linear + ReLU; result cast to bf16 so it can feed the MXU again.
    return jnp.maximum(_dot(z, w_ref[...]) + b_ref[...], 0.0).astype(jnp.bfloat16)


# ------------------------- kernel 1: per-token work -------------------------
# classifier heads + down-projection (fused matmul), arc biaffine, deprel FFNs

def per_token_kernel(
    # inputs
    x_ref,
    w_all_ref, b_all_ref,
    w_arc1_ref, b_arc1_ref, w_arc2_ref, b_arc2_ref,
    arc_a_ref, arc_u_ref, arc_v_ref, arc_c_ref,
    w_dep1_ref, b_dep1_ref, w_dep2_ref, b_dep2_ref,
    # outputs
    clsf_ref, heads_ref, h1d_ref, h2d_ref,
    *, s_pad,
):
    x = x_ref[0]                                              # (Lp, H) bf16

    # fused classifier heads + down-projection: one lane-dense matmul, one slab store
    fused = _dot(x, w_all_ref[...]) + b_all_ref[...]          # (Lp, s_pad + D) f32
    clsf_ref[0] = fused[:, :s_pad]                            # lane-dense (s_pad % 128 == 0)
    down = fused[:, s_pad:].astype(jnp.bfloat16)              # lane-aligned slice -> (Lp, D)

    # ---- arc biaffine (single output channel), bilinear split (no ones-concat) ----
    h1 = _ffn(down, w_arc1_ref, b_arc1_ref)                   # (Lp, D) bf16
    h2 = _ffn(down, w_arc2_ref, b_arc2_ref)
    # fold the j-dependent rank-1 term (arc_v) into stage 1 -> no M=1 matmul needed
    t = (_dot(h1, arc_a_ref[...]) + arc_v_ref[...]).astype(jnp.bfloat16)   # (Lp, D)
    core_col = _dot_nt(t, h2)                                 # (L_i, L_j): core + col term
    row = _dot(h1, arc_u_ref[...]) + arc_c_ref[...]           # (L_i, 1)
    heads_ref[0] = (core_col + row).astype(heads_ref.dtype)

    # ---- deprel FFN activations, consumed by the channel-group kernel ----
    h1d_ref[0] = _ffn(down, w_dep1_ref, b_dep1_ref)
    h2d_ref[0] = _ffn(down, w_dep2_ref, b_dep2_ref)


# ------------------------- kernel 2: deprel biaffine per channel group -------------------------

def deprel_group_kernel(
    h1d_ref, h2d_ref,
    dep_core_ref, dep_u_ref, dep_v_ref, dep_c_ref,
    deprels_ref,
    *, down_dim, o_blk,
):
    D = down_dim
    h1d = h1d_ref[0]                                          # (Lp, D) bf16
    h2d = h2d_ref[0]

    # stage 1: one lane-dense matmul over the whole channel group; fold in the rank-1
    # "u" term (the piece that multiplies h1d in stage 2).
    interm = (_dot(h2d, dep_core_ref[...]) + dep_u_ref[...]).astype(jnp.bfloat16)  # (L_j, o_blk*D)

    # (o, j)-dependent rank-1 "v" term; per-channel constant added below.
    vc = _dot_nt(h2d, dep_v_ref[...])                         # (L_j, o_blk) f32
    c_all = dep_c_ref[...]                                    # (o_blk, 1, 1) f32

    # stage 2: per-channel matmul + lane-dense (Lp, Lp) store; no cross-sublane regroup.
    for o in range(o_blk):
        blk = _dot_nt(interm[:, o * D:(o + 1) * D], h1d)      # (L_j, L_i)
        deprels_ref[0, o] = (blk + vc[:, o:o + 1] + c_all[o]).astype(deprels_ref.dtype)


# ------------------------- VMEM budgeting -------------------------

def _vmem_capacity_bytes():
    try:
        info = pltpu.get_tpu_info()
        cap = getattr(info, "vmem_capacity_bytes", None)
        if cap:
            return int(cap)
    except Exception:
        pass
    return 64 * 1024 * 1024   # conservative fallback (v7x-sized)


def _choose_o_block(o_total, D, Lp, out_bytes, budget):
    """Largest channel-group size (divisor of o_total) fitting the VMEM budget,
    restricted to groups whose blocks are (8,128)-legal."""
    def need(blk):
        return (2 * blk * Lp * Lp * out_bytes        # deprels out block, double-buffered
                + 2 * D * blk * D * 2                # dep_core (bf16), double-buffered
                + 2 * blk * D * (2 + 4)              # dep_v bf16 + dep_u_flat f32
                + 4 * Lp * D * 2                     # h1d / h2d blocks
                + Lp * blk * D * 6                   # interm f32 + bf16 copy
                + Lp * blk * 4                       # vc
                + 2 * Lp * Lp * 4)                   # per-channel f32 temp + cast

    candidates = [blk for blk in range(1, o_total + 1)
                  if o_total % blk == 0
                  and (blk == o_total or (blk % 8 == 0 and (blk * D) % 128 == 0))]
    fitting = [blk for blk in candidates if need(blk) <= budget]
    if fitting:
        return max(fitting)
    return min(candidates)


# ------------------------- parameter prep (glue, plain JAX) -------------------------

def prep_params(p, compute_dtype=jnp.bfloat16, lane=128):
    """Convert PyTorch-shaped params into kernel-ready, lane-aligned layouts."""

    def wT(name):
        return jnp.asarray(p[name][0], jnp.float32).T          # (in, out)

    def bias(name):
        return jnp.asarray(p[name][1], jnp.float32).reshape(1, -1)

    head_names = ("upos", "xpos", "feat", "lem")
    head_sizes = tuple(int(p[n][0].shape[0]) for n in head_names)
    w_heads = jnp.concatenate([wT(n) for n in head_names], axis=1)    # (H, s_heads)
    b_heads = jnp.concatenate([bias(n) for n in head_names], axis=1)
    s_heads = int(w_heads.shape[1])
    s_pad = _round_up(s_heads, lane)                                  # lane-dense clsf store
    if s_pad > s_heads:
        w_heads = jnp.pad(w_heads, ((0, 0), (0, s_pad - s_heads)))
        b_heads = jnp.pad(b_heads, ((0, 0), (0, s_pad - s_heads)))

    w_down = wT("down")                                               # (H, D)
    H, D = int(w_down.shape[0]), int(w_down.shape[1])
    w_all = jnp.concatenate([w_heads, w_down], axis=1).astype(compute_dtype)   # (H, s_pad + D)
    b_all = jnp.concatenate([b_heads, bias("down")], axis=1)                   # f32

    def ffn(name):
        return wT(name).astype(compute_dtype), bias(name)

    w_arc1, b_arc1 = ffn("arc1"); w_arc2, b_arc2 = ffn("arc2")
    w_dep1, b_dep1 = ffn("dep1"); w_dep2, b_dep2 = ffn("dep2")

    # --- arc pairwise weight (out = 1): split into core / rank-1 / const (no ones-concat) ---
    arc_w = jnp.asarray(p["arc_pair"], jnp.float32)              # (D+1, D+1, 1)
    dp1 = arc_w.shape[0]
    assert dp1 == D + 1
    arc_eff = arc_w.reshape(dp1, 1, dp1)[:, 0, :]                # W_eff[p, q]
    arc_a = arc_eff[:D, :D].astype(compute_dtype)                # (D, D)
    arc_u = arc_eff[:D, D].reshape(D, 1).astype(compute_dtype)   # i-dependent rank-1
    arc_v = arc_eff[D, :D].reshape(1, D)                         # j-dependent rank-1 (f32, folded)
    arc_c = arc_eff[D, D].reshape(1, 1)                          # f32

    # --- deprel pairwise weight: exact Stanza/Trankit flattening, split, channel pad to x8 ---
    dep_w = jnp.asarray(p["dep_pair"], jnp.float32)              # (D+1, D+1, O)
    O = int(dep_w.shape[2])
    dep_eff = dep_w.reshape(dp1, O, dp1)                         # W_eff[p, o, q]
    O_pad = _round_up(O, 8)
    if O_pad > O:
        dep_eff = jnp.pad(dep_eff, ((0, 0), (0, O_pad - O), (0, 0)))
    dep_core = jnp.transpose(dep_eff[:D, :, :D], (2, 1, 0)).reshape(D, O_pad * D)
    dep_core = dep_core.astype(compute_dtype)                    # [q, o*D + p]
    dep_u_flat = jnp.transpose(dep_eff[:D, :, D], (1, 0)).reshape(1, O_pad * D)  # f32, [o*D + p]
    dep_v = dep_eff[D, :, :D].astype(compute_dtype)              # (O_pad, D)  [o, q]
    dep_c = dep_eff[D, :, D].reshape(O_pad, 1, 1)                # f32

    return {
        "w_all": w_all, "b_all": b_all,
        "w_arc1": w_arc1, "b_arc1": b_arc1, "w_arc2": w_arc2, "b_arc2": b_arc2,
        "arc_a": arc_a, "arc_u": arc_u, "arc_v": arc_v, "arc_c": arc_c,
        "w_dep1": w_dep1, "b_dep1": b_dep1, "w_dep2": w_dep2, "b_dep2": b_dep2,
        "dep_core": dep_core, "dep_u_flat": dep_u_flat, "dep_v": dep_v, "dep_c": dep_c,
        "dims": dict(H=H, D=D, s_heads=s_heads, s_pad=s_pad, O=O, O_pad=O_pad,
                     head_sizes=head_sizes),
    }


# ------------------------- wrapper -------------------------

def pos_and_deprel_parser_head(x, params, *, deprels_dtype=jnp.bfloat16, o_blk=None):
    prep = prep_params(params)
    dims = prep["dims"]
    B, L, H = x.shape
    assert H == dims["H"]
    D, s_pad, O, O_pad = dims["D"], dims["s_pad"], dims["O"], dims["O_pad"]

    Lp = _round_up(max(L, 1), 128)                     # lane/sublane-dense L
    x_p = jnp.pad(x, ((0, 0), (0, Lp - L), (0, 0))).astype(jnp.bfloat16)

    vmem_cap = _vmem_capacity_bytes()
    vmem_limit = min(vmem_cap * 3 // 4, 100 * 1024 * 1024)     # ~48 MiB v7x, ~96 MiB v5e/v6e
    out_bytes = np.dtype(deprels_dtype).itemsize
    if o_blk is None:
        o_blk = _choose_o_block(O_pad, D, Lp, out_bytes, budget=int(vmem_limit * 0.7))
    assert O_pad % o_blk == 0
    n_groups = O_pad // o_blk

    # ---------------- call 1: per-token work (grid over B) ----------------
    w_names = ("w_all", "b_all", "w_arc1", "b_arc1", "w_arc2", "b_arc2",
               "arc_a", "arc_u", "arc_v", "arc_c",
               "w_dep1", "b_dep1", "w_dep2", "b_dep2")
    w_args = [prep[k] for k in w_names]

    def const1(a):
        nd = a.ndim
        return pl.BlockSpec(a.shape, lambda b, _nd=nd: (0,) * _nd)

    call1 = pl.pallas_call(
        functools.partial(per_token_kernel, s_pad=s_pad),
        out_shape=(
            jax.ShapeDtypeStruct((B, Lp, s_pad), jnp.float32),
            jax.ShapeDtypeStruct((B, Lp, Lp), jnp.float32),
            jax.ShapeDtypeStruct((B, Lp, D), jnp.bfloat16),
            jax.ShapeDtypeStruct((B, Lp, D), jnp.bfloat16),
        ),
        grid_spec=pltpu.PrefetchScalarGridSpec(
            num_scalar_prefetch=0,
            grid=(B,),
            in_specs=[pl.BlockSpec((1, Lp, H), lambda b: (b, 0, 0))]
                     + [const1(a) for a in w_args],
            out_specs=[
                pl.BlockSpec((1, Lp, s_pad), lambda b: (b, 0, 0)),
                pl.BlockSpec((1, Lp, Lp), lambda b: (b, 0, 0)),
                pl.BlockSpec((1, Lp, D), lambda b: (b, 0, 0)),
                pl.BlockSpec((1, Lp, D), lambda b: (b, 0, 0)),
            ],
        ),
        compiler_params=pltpu.CompilerParams(
            dimension_semantics=("parallel",),
            vmem_limit_bytes=int(vmem_limit),
        ),
    )
    clsf, heads_p, h1d, h2d = call1(x_p, *w_args)

    # ---------------- call 2: deprel biaffine (grid over B x channel groups) ----------------
    call2 = pl.pallas_call(
        functools.partial(deprel_group_kernel, down_dim=D, o_blk=o_blk),
        out_shape=jax.ShapeDtypeStruct((B, O_pad, Lp, Lp), deprels_dtype),
        grid_spec=pltpu.PrefetchScalarGridSpec(
            num_scalar_prefetch=0,
            grid=(B, n_groups),
            in_specs=[
                pl.BlockSpec((1, Lp, D), lambda b, g: (b, 0, 0)),       # h1d
                pl.BlockSpec((1, Lp, D), lambda b, g: (b, 0, 0)),       # h2d
                pl.BlockSpec((D, o_blk * D), lambda b, g: (0, g)),      # dep_core
                pl.BlockSpec((1, o_blk * D), lambda b, g: (0, g)),      # dep_u_flat
                pl.BlockSpec((o_blk, D), lambda b, g: (g, 0)),          # dep_v
                pl.BlockSpec((o_blk, 1, 1), lambda b, g: (g, 0, 0)),    # dep_c
            ],
            out_specs=pl.BlockSpec((1, o_blk, Lp, Lp), lambda b, g: (b, g, 0, 0)),
        ),
        compiler_params=pltpu.CompilerParams(
            dimension_semantics=("parallel", "parallel"),   # both axes shardable -> v7x 2 TCs
            vmem_limit_bytes=int(vmem_limit),
        ),
    )
    deprels_p = call2(h1d, h2d, prep["dep_core"], prep["dep_u_flat"],
                      prep["dep_v"], prep["dep_c"])

    # ---------------- unpad / split ----------------
    n_uposs, n_xposs, n_feats, n_lemma = dims["head_sizes"]
    clsf = clsf[:, :L]
    off = 0
    uposs = clsf[..., off:off + n_uposs]; off += n_uposs
    xposs = clsf[..., off:off + n_xposs]; off += n_xposs
    feats = clsf[..., off:off + n_feats]; off += n_feats
    lemma_scripts = clsf[..., off:off + n_lemma]
    heads = heads_p[:, :L, :L]
    deprels = deprels_p[:, :O, :L, :L]
    return uposs, xposs, feats, lemma_scripts, heads, deprels


# ------------------------- parameter setup (PyTorch-shaped) -------------------------

def init_params(key, H, n_uposs, n_xposs, n_feats, n_lemma, n_deprels):
    """Parameters in native PyTorch shapes: Linear weight (out, in), bias (out,),
    pairwise_weight (hid+1, hid+1, out)."""
    D = H // 4
    ks = jax.random.split(key, 11)

    def lin(k, out_f, in_f):
        kw, kb = jax.random.split(k)
        w = jax.random.normal(kw, (out_f, in_f), jnp.float32) * 0.1
        b = jax.random.normal(kb, (out_f,), jnp.float32) * 0.1
        return (w, b)

    return {
        "upos": lin(ks[0], n_uposs, H),
        "xpos": lin(ks[1], n_xposs, H),
        "feat": lin(ks[2], n_feats, H),
        "lem": lin(ks[3], n_lemma, H),
        "down": lin(ks[4], D, H),
        "arc1": lin(ks[5], D, D),
        "arc2": lin(ks[6], D, D),
        "dep1": lin(ks[7], D, D),
        "dep2": lin(ks[8], D, D),
        # PyTorch zero-inits pairwise_weight; random values keep the test non-degenerate.
        "arc_pair": jax.random.normal(ks[9], (D + 1, D + 1, 1), jnp.float32) * 0.1,
        "dep_pair": jax.random.normal(ks[10], (D + 1, D + 1, n_deprels), jnp.float32) * 0.1,
    }


# ------------------- pure-JAX f32 reference (mirrors the PyTorch code) -------------------

def reference(x, p):
    def lin(wb, z):
        w, b = wb
        return z @ w.T + b

    def biaffine(wb1, wb2, W, down):
        h1 = jax.nn.relu(lin(wb1, down))
        h2 = jax.nn.relu(lin(wb2, down))
        B_, L_, _ = h1.shape
        ones = jnp.ones((B_, L_, 1), jnp.float32)
        g1 = jnp.concatenate([h1, ones], axis=-1)
        g2 = jnp.concatenate([h2, ones], axis=-1)
        dp1, _, O = W.shape
        # literal transcription of the torch.mm / view / bmm trick
        interm = g1.reshape(-1, dp1) @ W.reshape(dp1, dp1 * O)          # (B*L, dp1*O)
        g2t = jnp.transpose(g2, (0, 2, 1))                              # (B, dp1, L)
        out = jnp.matmul(interm.reshape(B_, L_ * O, dp1), g2t)          # (B, L*O, L)
        out = jnp.transpose(out.reshape(B_, L_, O, L_), (0, 1, 3, 2))   # (B, L, L, O)
        return out

    uposs = lin(p["upos"], x)
    xposs = lin(p["xpos"], x)
    feats = lin(p["feat"], x)
    lemmas = lin(p["lem"], x)
    down = lin(p["down"], x)
    arc_scores = biaffine(p["arc1"], p["arc2"], p["arc_pair"], down)
    dep_scores = biaffine(p["dep1"], p["dep2"], p["dep_pair"], down)
    heads = arc_scores[..., 0]                                 # squeeze(3)
    deprels = jnp.transpose(dep_scores, (0, 3, 2, 1))          # permute(0, 3, 2, 1)
    return (uposs, xposs, feats, lemmas, heads, deprels)


if __name__ == "__main__":
    # toy shapes: batch=2, seq=8, hidden=32 (down_dim=8); n_deprels=32 so the channel
    # padding / grouping logic is exercised with aligned divisors.
    B, L, H = 2, 8, 32
    n_uposs, n_xposs, n_feats, n_lemma, n_deprels = 16, 12, 20, 24, 32

    key = jax.random.PRNGKey(0)
    kx, kp = jax.random.split(key)
    x = jax.random.normal(kx, (B, L, H), jnp.float32)
    params = init_params(kp, H, n_uposs, n_xposs, n_feats, n_lemma, n_deprels)

    outs = pos_and_deprel_parser_head(x, params)
    outs = jax.block_until_ready(outs)

    refs = reference(x, params)
    names = ("uposs", "xposs", "feats", "lemma_scripts", "heads", "deprels")
    tols = {"deprels": 3e-2}   # deprels stored in bf16
    for name, got, want in zip(names, outs, refs):
        assert got.shape == want.shape, (name, got.shape, want.shape)
        tol = tols.get(name, 2e-2)
        got32 = np.asarray(jnp.asarray(got, jnp.float32))
        np.testing.assert_allclose(got32, np.asarray(want),
                                   rtol=tol, atol=tol, err_msg=name)

    print("KERNEL_OK")
</pallas_src>

<mosaic_0001>
module attributes {stable_mosaic.version = 11 : i64} {
  func.func @per_token_kernel(%arg0: i32, %arg1: memref<1x128x32xbf16, #tpu.memory_space<vmem>>, %arg2: memref<32x136xbf16, #tpu.memory_space<vmem>>, %arg3: memref<1x136xf32, #tpu.memory_space<vmem>>, %arg4: memref<8x8xbf16, #tpu.memory_space<vmem>>, %arg5: memref<1x8xf32, #tpu.memory_space<vmem>>, %arg6: memref<8x8xbf16, #tpu.memory_space<vmem>>, %arg7: memref<1x8xf32, #tpu.memory_space<vmem>>, %arg8: memref<8x8xbf16, #tpu.memory_space<vmem>>, %arg9: memref<8x1xbf16, #tpu.memory_space<vmem>>, %arg10: memref<1x8xf32, #tpu.memory_space<vmem>>, %arg11: memref<1x1xf32, #tpu.memory_space<vmem>>, %arg12: memref<8x8xbf16, #tpu.memory_space<vmem>>, %arg13: memref<1x8xf32, #tpu.memory_space<vmem>>, %arg14: memref<8x8xbf16, #tpu.memory_space<vmem>>, %arg15: memref<1x8xf32, #tpu.memory_space<vmem>>, %arg16: memref<1x128x128xf32, #tpu.memory_space<vmem>>, %arg17: memref<1x128x128xf32, #tpu.memory_space<vmem>>, %arg18: memref<1x128x8xbf16, #tpu.memory_space<vmem>>, %arg19: memref<1x128x8xbf16, #tpu.memory_space<vmem>>) attributes {dimension_semantics = [#tpu.dimension_semantics<parallel>], iteration_bounds = array<i64: 2>, scalar_prefetch = 0 : i64, scratch_operands = 0 : i64, tpu.core_type = #tpu.core_type<tc>, window_params = [{transform_indices = @transform_0, window_bounds = array<i64: 1, 128, 32>}, {pipeline_mode = #tpu.pipeline_mode<synchronous>, transform_indices = @transform_1, window_bounds = array<i64: 32, 136>}, {pipeline_mode = #tpu.pipeline_mode<synchronous>, transform_indices = @transform_2, window_bounds = array<i64: 1, 136>}, {pipeline_mode = #tpu.pipeline_mode<synchronous>, transform_indices = @transform_3, window_bounds = array<i64: 8, 8>}, {pipeline_mode = #tpu.pipeline_mode<synchronous>, transform_indices = @transform_4, window_bounds = array<i64: 1, 8>}, {pipeline_mode = #tpu.pipeline_mode<synchronous>, transform_indices = @transform_5, window_bounds = array<i64: 8, 8>}, {pipeline_mode = #tpu.pipeline_mode<synchronous>, transform_indices = @transform_6, window_bounds = array<i64: 1, 8>}, {pipeline_mode = #tpu.pipeline_mode<synchronous>, transform_indices = @transform_7, window_bounds = array<i64: 8, 8>}, {pipeline_mode = #tpu.pipeline_mode<synchronous>, transform_indices = @transform_8, window_bounds = array<i64: 8, 1>}, {pipeline_mode = #tpu.pipeline_mode<synchronous>, transform_indices = @transform_9, window_bounds = array<i64: 1, 8>}, {pipeline_mode = #tpu.pipeline_mode<synchronous>, transform_indices = @transform_10, window_bounds = array<i64: 1, 1>}, {pipeline_mode = #tpu.pipeline_mode<synchronous>, transform_indices = @transform_11, window_bounds = array<i64: 8, 8>}, {pipeline_mode = #tpu.pipeline_mode<synchronous>, transform_indices = @transform_12, window_bounds = array<i64: 1, 8>}, {pipeline_mode = #tpu.pipeline_mode<synchronous>, transform_indices = @transform_13, window_bounds = array<i64: 8, 8>}, {pipeline_mode = #tpu.pipeline_mode<synchronous>, transform_indices = @transform_14, window_bounds = array<i64: 1, 8>}, {transform_indices = @transform_15, window_bounds = array<i64: 1, 128, 128>}, {transform_indices = @transform_16, window_bounds = array<i64: 1, 128, 128>}, {transform_indices = @transform_17, window_bounds = array<i64: 1, 128, 8>}, {transform_indices = @transform_18, window_bounds = array<i64: 1, 128, 8>}]} {
    %c0 = arith.constant 0 : index
    %c0_0 = arith.constant 0 : index
    %c0_1 = arith.constant 0 : index
    %0 = vector.load %arg1[%c0, %c0_0, %c0_1] : memref<1x128x32xbf16, #tpu.memory_space<vmem>>, vector<1x128x32xbf16>
    %1 = vector.shape_cast %0 : vector<1x128x32xbf16> to vector<128x32xbf16>
    %c0_2 = arith.constant 0 : index
    %c0_3 = arith.constant 0 : index
    %2 = vector.load %arg2[%c0_2, %c0_3] : memref<32x136xbf16, #tpu.memory_space<vmem>>, vector<32x136xbf16>
    %cst = arith.constant dense<0.000000e+00> : vector<128x136xf32>
    %3 = tpu.matmul %1, %2, %cst {dimension_numbers = #tpu.dot_dimension_numbers<[1], [0], [0], [1], [0, 0, 1, 1], [], []>} : vector<128x32xbf16>, vector<32x136xbf16>, vector<128x136xf32> -> vector<128x136xf32>
    %c0_4 = arith.constant 0 : index
    %c0_5 = arith.constant 0 : index
    %4 = vector.load %arg3[%c0_4, %c0_5] : memref<1x136xf32, #tpu.memory_space<vmem>>, vector<1x136xf32>
    %5 = vector.broadcast %4 : vector<1x136xf32> to vector<128x136xf32>
    %6 = arith.addf %3, %5 : vector<128x136xf32>
    %7 = vector.extract_strided_slice %6 {offsets = [0, 0], sizes = [128, 128], strides = [1, 1]} : vector<128x136xf32> to vector<128x128xf32>
    %c0_6 = arith.constant 0 : index
    %c0_7 = arith.constant 0 : index
    %c0_8 = arith.constant 0 : index
    %8 = vector.load %arg16[%c0_6, %c0_7, %c0_8] : memref<1x128x128xf32, #tpu.memory_space<vmem>>, vector<1x128x128xf32>
    %9 = vector.shape_cast %8 : vector<1x128x128xf32> to vector<128x128xf32>
    %10 = vector.shape_cast %7 : vector<128x128xf32> to vector<1x128x128xf32>
    tpu.vector_store %arg16[%c0_6, %c0_7, %c0_8], %10 {strides = array<i32>} : memref<1x128x128xf32, #tpu.memory_space<vmem>>, vector<1x128x128xf32>,
    %11 = vector.extract_strided_slice %6 {offsets = [0, 128], sizes = [128, 8], strides = [1, 1]} : vector<128x136xf32> to vector<128x8xf32>
    %12 = arith.truncf %11 : vector<128x8xf32> to vector<128x8xbf16>
    %c0_9 = arith.constant 0 : index
    %c0_10 = arith.constant 0 : index
    %13 = vector.load %arg4[%c0_9, %c0_10] : memref<8x8xbf16, #tpu.memory_space<vmem>>, vector<8x8xbf16>
    %cst_11 = arith.constant dense<0.000000e+00> : vector<128x8xf32>
    %14 = tpu.matmul %12, %13, %cst_11 {dimension_numbers = #tpu.dot_dimension_numbers<[1], [0], [0], [1], [0, 0, 1, 1], [], []>} : vector<128x8xbf16>, vector<8x8xbf16>, vector<128x8xf32> -> vector<128x8xf32>
    %c0_12 = arith.constant 0 : index
    %c0_13 = arith.constant 0 : index
    %15 = vector.load %arg5[%c0_12, %c0_13] : memref<1x8xf32, #tpu.memory_space<vmem>>, vector<1x8xf32>
    %16 = vector.broadcast %15 : vector<1x8xf32> to vector<128x8xf32>
    %17 = arith.addf %14, %16 : vector<128x8xf32>
    %cst_14 = arith.constant 0.000000e+00 : f32
    %18 = vector.broadcast %cst_14 : f32 to vector<128x8xf32>
    %19 = arith.maximumf %17, %18 : vector<128x8xf32>
    %20 = arith.truncf %19 : vector<128x8xf32> to vector<128x8xbf16>
    %c0_15 = arith.constant 0 : index
    %c0_16 = arith.constant 0 : index
    %21 = vector.load %arg6[%c0_15, %c0_16] : memref<8x8xbf16, #tpu.memory_space<vmem>>, vector<8x8xbf16>
    %cst_17 = arith.constant dense<0.000000e+00> : vector<128x8xf32>
    %22 = tpu.matmul %12, %21, %cst_17 {dimension_numbers = #tpu.dot_dimension_numbers<[1], [0], [0], [1], [0, 0, 1, 1], [], []>} : vector<128x8xbf16>, vector<8x8xbf16>, vector<128x8xf32> -> vector<128x8xf32>
    %c0_18 = arith.constant 0 : index
    %c0_19 = arith.constant 0 : index
    %23 = vector.load %arg7[%c0_18, %c0_19] : memref<1x8xf32, #tpu.memory_space<vmem>>, vector<1x8xf32>
    %24 = vector.broadcast %23 : vector<1x8xf32> to vector<128x8xf32>
    %25 = arith.addf %22, %24 : vector<128x8xf32>
    %cst_20 = arith.constant 0.000000e+00 : f32
    %26 = vector.broadcast %cst_20 : f32 to vector<128x8xf32>
    %27 = arith.maximumf %25, %26 : vector<128x8xf32>
    %28 = arith.truncf %27 : vector<128x8xf32> to vector<128x8xbf16>
    %c0_21 = arith.constant 0 : index
    %c0_22 = arith.constant 0 : index
    %29 = vector.load %arg8[%c0_21, %c0_22] : memref<8x8xbf16, #tpu.memory_space<vmem>>, vector<8x8xbf16>
    %cst_23 = arith.constant dense<0.000000e+00> : vector<128x8xf32>
    %30 = tpu.matmul %20, %29, %cst_23 {dimension_numbers = #tpu.dot_dimension_numbers<[1], [0], [0], [1], [0, 0, 1, 1], [], []>} : vector<128x8xbf16>, vector<8x8xbf16>, vector<128x8xf32> -> vector<128x8xf32>
    %c0_24 = arith.constant 0 : index
    %c0_25 = arith.constant 0 : index
    %31 = vector.load %arg10[%c0_24, %c0_25] : memref<1x8xf32, #tpu.memory_space<vmem>>, vector<1x8xf32>
    %32 = vector.broadcast %31 : vector<1x8xf32> to vector<128x8xf32>
    %33 = arith.addf %30, %32 : vector<128x8xf32>
    %34 = arith.truncf %33 : vector<128x8xf32> to vector<128x8xbf16>
    %cst_26 = arith.constant dense<0.000000e+00> : vector<128x128xf32>
    %35 = tpu.matmul %34, %28, %cst_26 {dimension_numbers = #tpu.dot_dimension_numbers<[1], [1], [0], [0], [0, 0, 1, 0], [], []>} : vector<128x8xbf16>, vector<128x8xbf16>, vector<128x128xf32> -> vector<128x128xf32>
    %c0_27 = arith.constant 0 : index
    %c0_28 = arith.constant 0 : index
    %36 = vector.load %arg9[%c0_27, %c0_28] : memref<8x1xbf16, #tpu.memory_space<vmem>>, vector<8x1xbf16>
    %cst_29 = arith.constant dense<0.000000e+00> : vector<128x1xf32>
    %37 = tpu.matmul %20, %36, %cst_29 {dimension_numbers = #tpu.dot_dimension_numbers<[1], [0], [0], [1], [0, 0, 1, 1], [], []>} : vector<128x8xbf16>, vector<8x1xbf16>, vector<128x1xf32> -> vector<128x1xf32>
    %c0_30 = arith.constant 0 : index
    %c0_31 = arith.constant 0 : index
    %38 = vector.load %arg11[%c0_30, %c0_31] : memref<1x1xf32, #tpu.memory_space<vmem>>, vector<1x1xf32>
    %39 = vector.broadcast %38 : vector<1x1xf32> to vector<128x1xf32>
    %40 = arith.addf %37, %39 : vector<128x1xf32>
    %41 = vector.broadcast %40 : vector<128x1xf32> to vector<128x128xf32>
    %42 = arith.addf %35, %41 : vector<128x128xf32>
    %c0_32 = arith.constant 0 : index
    %c0_33 = arith.constant 0 : index
    %c0_34 = arith.constant 0 : index
    %43 = vector.load %arg17[%c0_32, %c0_33, %c0_34] : memref<1x128x128xf32, #tpu.memory_space<vmem>>, vector<1x128x128xf32>
    %44 = vector.shape_cast %43 : vector<1x128x128xf32> to vector<128x128xf32>
    %45 = vector.shape_cast %42 : vector<128x128xf32> to vector<1x128x128xf32>
    tpu.vector_store %arg17[%c0_32, %c0_33, %c0_34], %45 {strides = array<i32>} : memref<1x128x128xf32, #tpu.memory_space<vmem>>, vector<1x128x128xf32>,
    %c0_35 = arith.constant 0 : index
    %c0_36 = arith.constant 0 : index
    %46 = vector.load %arg12[%c0_35, %c0_36] : memref<8x8xbf16, #tpu.memory_space<vmem>>, vector<8x8xbf16>
    %cst_37 = arith.constant dense<0.000000e+00> : vector<128x8xf32>
    %47 = tpu.matmul %12, %46, %cst_37 {dimension_numbers = #tpu.dot_dimension_numbers<[1], [0], [0], [1], [0, 0, 1, 1], [], []>} : vector<128x8xbf16>, vector<8x8xbf16>, vector<128x8xf32> -> vector<128x8xf32>
    %c0_38 = arith.constant 0 : index
    %c0_39 = arith.constant 0 : index
    %48 = vector.load %arg13[%c0_38, %c0_39] : memref<1x8xf32, #tpu.memory_space<vmem>>, vector<1x8xf32>
    %49 = vector.broadcast %48 : vector<1x8xf32> to vector<128x8xf32>
    %50 = arith.addf %47, %49 : vector<128x8xf32>
    %cst_40 = arith.constant 0.000000e+00 : f32
    %51 = vector.broadcast %cst_40 : f32 to vector<128x8xf32>
    %52 = arith.maximumf %50, %51 : vector<128x8xf32>
    %53 = arith.truncf %52 : vector<128x8xf32> to vector<128x8xbf16>
    %c0_41 = arith.constant 0 : index
    %c0_42 = arith.constant 0 : index
    %c0_43 = arith.constant 0 : index
    %54 = vector.load %arg18[%c0_41, %c0_42, %c0_43] : memref<1x128x8xbf16, #tpu.memory_space<vmem>>, vector<1x128x8xbf16>
    %55 = vector.shape_cast %54 : vector<1x128x8xbf16> to vector<128x8xbf16>
    %56 = vector.shape_cast %53 : vector<128x8xbf16> to vector<1x128x8xbf16>
    tpu.vector_store %arg18[%c0_41, %c0_42, %c0_43], %56 {strides = array<i32>} : memref<1x128x8xbf16, #tpu.memory_space<vmem>>, vector<1x128x8xbf16>,
    %c0_44 = arith.constant 0 : index
    %c0_45 = arith.constant 0 : index
    %57 = vector.load %arg14[%c0_44, %c0_45] : memref<8x8xbf16, #tpu.memory_space<vmem>>, vector<8x8xbf16>
    %cst_46 = arith.constant dense<0.000000e+00> : vector<128x8xf32>
    %58 = tpu.matmul %12, %57, %cst_46 {dimension_numbers = #tpu.dot_dimension_numbers<[1], [0], [0], [1], [0, 0, 1, 1], [], []>} : vector<128x8xbf16>, vector<8x8xbf16>, vector<128x8xf32> -> vector<128x8xf32>
    %c0_47 = arith.constant 0 : index
    %c0_48 = arith.constant 0 : index
    %59 = vector.load %arg15[%c0_47, %c0_48] : memref<1x8xf32, #tpu.memory_space<vmem>>, vector<1x8xf32>
    %60 = vector.broadcast %59 : vector<1x8xf32> to vector<128x8xf32>
    %61 = arith.addf %58, %60 : vector<128x8xf32>
    %cst_49 = arith.constant 0.000000e+00 : f32
    %62 = vector.broadcast %cst_49 : f32 to vector<128x8xf32>
    %63 = arith.maximumf %61, %62 : vector<128x8xf32>
    %64 = arith.truncf %63 : vector<128x8xf32> to vector<128x8xbf16>
    %c0_50 = arith.constant 0 : index
    %c0_51 = arith.constant 0 : index
    %c0_52 = arith.constant 0 : index
    %65 = vector.load %arg19[%c0_50, %c0_51, %c0_52] : memref<1x128x8xbf16, #tpu.memory_space<vmem>>, vector<1x128x8xbf16>
    %66 = vector.shape_cast %65 : vector<1x128x8xbf16> to vector<128x8xbf16>
    %67 = vector.shape_cast %64 : vector<128x8xbf16> to vector<1x128x8xbf16>
    tpu.vector_store %arg19[%c0_50, %c0_51, %c0_52], %67 {strides = array<i32>} : memref<1x128x8xbf16, #tpu.memory_space<vmem>>, vector<1x128x8xbf16>,
    return
  }
  func.func @transform_0(%arg0: i32) -> (i32, i32, i32) {
    %c0_i32 = arith.constant 0 : i32
    %c0_i32_0 = arith.constant 0 : i32
    %c0_i32_1 = arith.constant 0 : i32
    return %arg0, %c0_i32, %c0_i32_0 : i32, i32, i32
  }
  func.func @transform_1(%arg0: i32) -> (i32, i32) {
    %c0_i32 = arith.constant 0 : i32
    %c0_i32_0 = arith.constant 0 : i32
    %c0_i32_1 = arith.constant 0 : i32
    return %c0_i32, %c0_i32_0 : i32, i32
  }
  func.func @transform_2(%arg0: i32) -> (i32, i32) {
    %c0_i32 = arith.constant 0 : i32
    %c0_i32_0 = arith.constant 0 : i32
    %c0_i32_1 = arith.constant 0 : i32
    return %c0_i32, %c0_i32_0 : i32, i32
  }
  func.func @transform_3(%arg0: i32) -> (i32, i32) {
    %c0_i32 = arith.constant 0 : i32
    %c0_i32_0 = arith.constant 0 : i32
    %c0_i32_1 = arith.constant 0 : i32
    return %c0_i32, %c0_i32_0 : i32, i32
  }
  func.func @transform_4(%arg0: i32) -> (i32, i32) {
    %c0_i32 = arith.constant 0 : i32
    %c0_i32_0 = arith.constant 0 : i32
    %c0_i32_1 = arith.constant 0 : i32
    return %c0_i32, %c0_i32_0 : i32, i32
  }
  func.func @transform_5(%arg0: i32) -> (i32, i32) {
    %c0_i32 = arith.constant 0 : i32
    %c0_i32_0 = arith.constant 0 : i32
    %c0_i32_1 = arith.constant 0 : i32
    return %c0_i32, %c0_i32_0 : i32, i32
  }
  func.func @transform_6(%arg0: i32) -> (i32, i32) {
    %c0_i32 = arith.constant 0 : i32
    %c0_i32_0 = arith.constant 0 : i32
    %c0_i32_1 = arith.constant 0 : i32
    return %c0_i32, %c0_i32_0 : i32, i32
  }
  func.func @transform_7(%arg0: i32) -> (i32, i32) {
    %c0_i32 = arith.constant 0 : i32
    %c0_i32_0 = arith.constant 0 : i32
    %c0_i32_1 = arith.constant 0 : i32
    return %c0_i32, %c0_i32_0 : i32, i32
  }
  func.func @transform_8(%arg0: i32) -> (i32, i32) {
    %c0_i32 = arith.constant 0 : i32
    %c0_i32_0 = arith.constant 0 : i32
    %c0_i32_1 = arith.constant 0 : i32
    return %c0_i32, %c0_i32_0 : i32, i32
  }
  func.func @transform_9(%arg0: i32) -> (i32, i32) {
    %c0_i32 = arith.constant 0 : i32
    %c0_i32_0 = arith.constant 0 : i32
    %c0_i32_1 = arith.constant 0 : i32
    return %c0_i32, %c0_i32_0 : i32, i32
  }
  func.func @transform_10(%arg0: i32) -> (i32, i32) {
    %c0_i32 = arith.constant 0 : i32
    %c0_i32_0 = arith.constant 0 : i32
    %c0_i32_1 = arith.constant 0 : i32
    return %c0_i32, %c0_i32_0 : i32, i32
  }
  func.func @transform_11(%arg0: i32) -> (i32, i32) {
    %c0_i32 = arith.constant 0 : i32
    %c0_i32_0 = arith.constant 0 : i32
    %c0_i32_1 = arith.constant 0 : i32
    return %c0_i32, %c0_i32_0 : i32, i32
  }
  func.func @transform_12(%arg0: i32) -> (i32, i32) {
    %c0_i32 = arith.constant 0 : i32
    %c0_i32_0 = arith.constant 0 : i32
    %c0_i32_1 = arith.constant 0 : i32
    return %c0_i32, %c0_i32_0 : i32, i32
  }
  func.func @transform_13(%arg0: i32) -> (i32, i32) {
    %c0_i32 = arith.constant 0 : i32
    %c0_i32_0 = arith.constant 0 : i32
    %c0_i32_1 = arith.constant 0 : i32
    return %c0_i32, %c0_i32_0 : i32, i32
  }
  func.func @transform_14(%arg0: i32) -> (i32, i32) {
    %c0_i32 = arith.constant 0 : i32
    %c0_i32_0 = arith.constant 0 : i32
    %c0_i32_1 = arith.constant 0 : i32
    return %c0_i32, %c0_i32_0 : i32, i32
  }
  func.func @transform_15(%arg0: i32) -> (i32, i32, i32) {
    %c0_i32 = arith.constant 0 : i32
    %c0_i32_0 = arith.constant 0 : i32
    %c0_i32_1 = arith.constant 0 : i32
    return %arg0, %c0_i32, %c0_i32_0 : i32, i32, i32
  }
  func.func @transform_16(%arg0: i32) -> (i32, i32, i32) {
    %c0_i32 = arith.constant 0 : i32
    %c0_i32_0 = arith.constant 0 : i32
    %c0_i32_1 = arith.constant 0 : i32
    return %arg0, %c0_i32, %c0_i32_0 : i32, i32, i32
  }
  func.func @transform_17(%arg0: i32) -> (i32, i32, i32) {
    %c0_i32 = arith.constant 0 : i32
    %c0_i32_0 = arith.constant 0 : i32
    %c0_i32_1 = arith.constant 0 : i32
    return %arg0, %c0_i32, %c0_i32_0 : i32, i32, i32
  }
  func.func @transform_18(%arg0: i32) -> (i32, i32, i32) {
    %c0_i32 = arith.constant 0 : i32
    %c0_i32_0 = arith.constant 0 : i32
    %c0_i32_1 = arith.constant 0 : i32
    return %arg0, %c0_i32, %c0_i32_0 : i32, i32, i32
  }
}

</mosaic_0001>

<llo_original>
// kernel: tpu_custom_call.1
$region0: #{tpu_custom_call.1}
  #allocation0 [shape = 'u32[]', space=smem, size = 0x4, offset = 0x4, fixed_abs, tag = 'smem constant byte address 0x4 - core index']
  #allocation1 [shape = 'u32[72,128]{1,0:T(1,128)}', space=vmem, size = 0x9000, scoped, tag = 'internal scratch']
  #allocation2 [shape = 'f32[1,1]{1,0:T(1,128)S(1)}', space=vmem, size = 0x200, scoped, tag = 'scoped memory for tpu_custom_call.1']
  %s0 = inlined_call_operand.vmem [shape: bf16[2,128,32], index: 0, kind: input, shape index: {}]
  %s1 = inlined_call_operand.vmem [shape: bf16[32,136], index: 1, kind: input, shape index: {}]
  %s2 = inlined_call_operand.vmem [shape: f32[1,136], index: 2, kind: input, shape index: {}]
  %s3 = inlined_call_operand.vmem [shape: bf16[8,8], index: 3, kind: input, shape index: {}]
  %s4 = inlined_call_operand.vmem [shape: f32[1,8], index: 4, kind: input, shape index: {}]
  %s5 = inlined_call_operand.vmem [shape: bf16[8,8], index: 5, kind: input, shape index: {}]
  %s6 = inlined_call_operand.vmem [shape: f32[1,8], index: 6, kind: input, shape index: {}]
  %s7 = inlined_call_operand.vmem [shape: bf16[8,8], index: 7, kind: input, shape index: {}]
  %s8 = inlined_call_operand.vmem [shape: bf16[8,1], index: 8, kind: input, shape index: {}]
  %s9 = inlined_call_operand.vmem [shape: f32[1,8], index: 9, kind: input, shape index: {}]
  %s10 = inlined_call_operand.<no memory space> [shape: f32[1,1], index: 10, kind: input, shape index: {}]
  %s11 = inlined_call_operand.vmem [shape: bf16[8,8], index: 11, kind: input, shape index: {}]
  %s12 = inlined_call_operand.vmem [shape: f32[1,8], index: 12, kind: input, shape index: {}]
  %s13 = inlined_call_operand.vmem [shape: bf16[8,8], index: 13, kind: input, shape index: {}]
  %s14 = inlined_call_operand.vmem [shape: f32[1,8], index: 14, kind: input, shape index: {}]
  %s15 = inlined_call_operand.hbm [shape: f32[2,128,128], index: 15, kind: output, shape index: {0}]
  %s16 = inlined_call_operand.hbm [shape: f32[2,128,128], index: 16, kind: output, shape index: {1}]
  %s17 = inlined_call_operand.vmem [shape: bf16[2,128,8], index: 17, kind: output, shape index: {2}]
  %s18 = inlined_call_operand.vmem [shape: bf16[2,128,8], index: 18, kind: output, shape index: {3}]
  %19 = xla_tuple %s15, %s16, %s17, %s18
  %s20 = sld [smem:[#allocation0]]
  $region117: #{tpu_custom_call.1} parent=0
    _
  %s22 = ssub.s32 1, %s20
  %s23 = scalar_select 0, %s22, %s20
  %v24 = vstv %s10
  %25 = vst [vmem:[#allocation2] sm:$0x1] %v24
  $region1: #{tpu_custom_call.1} parent=0
    #allocation3 [shape = 'u8[131072]{0}', space=vmem, size = 0x20000, scoped, tag = 'output window, operand 0']
    #allocation4 [shape = 's32[2]{0}', space=sflag, size = 0x8, scoped, tag = 'scoped memory for tpu_custom_call.1']
    #allocation5 [shape = 'u8[131072]{0}', space=vmem, size = 0x20000, scoped, tag = 'output window, operand 1']
    #allocation6 [shape = 's32[2]{0}', space=sflag, size = 0x8, scoped, tag = 'scoped memory for tpu_custom_call.1']
    %26 = vsyncpa [#allocation4], 0
    %s27 = scalar_lea.sflag [#allocation4], 1
    %28 = vsyncpa %s27, 0
    %29 = vsyncpa [#allocation6], 0
    %s30 = scalar_lea.sflag [#allocation6], 1
    %31 = vsyncpa %s30, 0
    loop: start=0, step=1, limit=4
    $region2: #{tpu_custom_call.1} parent=1 // loop_pre_header
      _
    $region3: #{tpu_custom_call.1} parent=1 // loop_header
      %s33 = sphi 0, %s37
      %p34 = scmp.ge.s32.totalorder %s33, 4
      %s43 = sphi 0, %s45
      %s46 = sphi 0, %s43
      %s47 = sphi 0, %s46
      %s63 = sphi 0, %s47
      %s67 = sphi 0, %s67
      %s69 = sphi 0, %s67
      %s70 = sphi 0, %s69
      %s84 = sphi 0, %s70
      %s88 = sphi 0, %s88
      %s90 = sphi 0, %s88
      %s91 = sphi 0, %s90
      %s105 = sphi 0, %s91
      %s109 = sphi 0, %s109
      %s111 = sphi 0, %s109
      %s112 = sphi 0, %s111
      %s126 = sphi 0, %s112
      %s130 = sphi 0, %s130
      %s132 = sphi 0, %s130
      %s133 = sphi 0, %s132
      %s147 = sphi 0, %s133
      %s151 = sphi 0, %s151
      %s153 = sphi 0, %s151
      %s154 = sphi 0, %s153
      %s168 = sphi 0, %s154
      %s172 = sphi 0, %s172
      %s174 = sphi 0, %s172
      %s175 = sphi 0, %s174
      %s189 = sphi 0, %s175
      %s193 = sphi 0, %s193
      %s195 = sphi 0, %s193
      %s196 = sphi 0, %s195
      %s210 = sphi 0, %s196
      %s214 = sphi 0, %s214
      %s216 = sphi 0, %s214
      %s217 = sphi 0, %s216
      %s231 = sphi 0, %s217
      %s235 = sphi 0, %s235
      %s237 = sphi 0, %s235
      %s238 = sphi 0, %s237
      %s252 = sphi 0, %s238
      %s256 = sphi 0, %s256
      %s258 = sphi 0, %s256
      %s259 = sphi 0, %s258
      %s273 = sphi 0, %s259
      %s277 = sphi 0, %s277
      %s279 = sphi 0, %s277
      %s280 = sphi 0, %s279
      %s294 = sphi 0, %s280
      %s298 = sphi 0, %s298
      %s300 = sphi 0, %s298
      %s301 = sphi 0, %s300
      %s315 = sphi 0, %s301
      %s319 = sphi 0, %s319
      %s321 = sphi 0, %s319
      %s322 = sphi 0, %s321
      %s336 = sphi 0, %s322
      %s340 = sphi 0, %s340
      %s342 = sphi 0, %s340
      %s343 = sphi 0, %s342
      %s357 = sphi 0, %s343
      %s363 = sphi 0, %s365
      %s366 = sphi 0, %s363
      %s367 = sphi 0, %s366
      %s383 = sphi 0, %s367
      %s389 = sphi 0, %s391
      %s392 = sphi 0, %s389
      %s393 = sphi 0, %s392
      %s409 = sphi 0, %s393
      %s415 = sphi 0, %s417
      %s418 = sphi 0, %s415
      %s419 = sphi 0, %s418
      %s435 = sphi 0, %s419
      %s441 = sphi 0, %s443
      %s444 = sphi 0, %s441
      %s445 = sphi 0, %s444
      %s461 = sphi 0, %s445
    $region4: #{tpu_custom_call.1} parent=1 // loop_header_branch
      %36 = sbr.rel (%p34) target = $region8
    $region5: #{tpu_custom_call.1} parent=1 // loop_body
      %s38 = ssub.s32 %s33, 1
      %s39 = ssub.s32 %s33, 2
      %s40 = sadd.s32 %s33, 1
      %s41 = ssub.s32 %s33, %s40
      %p42 = scmp.eq.s32.totalorder %s41, 0
      %s44 = sadd.s32 %s43, 1
      %s45 = scalar_select %p42, %s43, %s44
      %p48 = pneg %p42
      %p49 = scmp.eq.s32.totalorder %s33, 1
      %p50 = por %p48, %p49
      %p51 = scmp.ne.s32.totalorder %s43, %s46
      %p52 = scmp.eq.s32.totalorder %s33, 0
      %p53 = por %p51, %p52
      %p54 = scmp.ne.s32.totalorder %s43, %s46
      %p55 = scmp.eq.s32.totalorder %s38, 1
      %p56 = por %p54, %p55
      %p57 = scmp.ne.s32.totalorder %s46, %s47
      %p58 = scmp.eq.s32.totalorder %s38, 0
      %p59 = por %p57, %p58
      %p60 = scmp.ne.s32.totalorder %s46, %s47
      %p61 = scmp.eq.s32.totalorder %s39, 1
      %p62 = por %p60, %p61
      %p64 = scmp.ne.s32.totalorder %s47, %s63
      %p65 = scmp.eq.s32.totalorder %s39, 0
      %p66 = por %p64, %p65
      %s68 = sadd.s32 %s67, 1
      %p71 = scmp.eq.s32.totalorder %s33, 1
      %p72 = scmp.ne.s32.totalorder %s67, %s69
      %p73 = scmp.eq.s32.totalorder %s33, 0
      %p74 = por %p72, %p73
      %p75 = scmp.ne.s32.totalorder %s67, %s69
      %p76 = scmp.eq.s32.totalorder %s38, 1
      %p77 = por %p75, %p76
      %p78 = scmp.ne.s32.totalorder %s69, %s70
      %p79 = scmp.eq.s32.totalorder %s38, 0
      %p80 = por %p78, %p79
      %p81 = scmp.ne.s32.totalorder %s69, %s70
      %p82 = scmp.eq.s32.totalorder %s39, 1
      %p83 = por %p81, %p82
      %p85 = scmp.ne.s32.totalorder %s70, %s84
      %p86 = scmp.eq.s32.totalorder %s39, 0
      %p87 = por %p85, %p86
      %s89 = sadd.s32 %s88, 1
      %p92 = scmp.eq.s32.totalorder %s33, 1
      %p93 = scmp.ne.s32.totalorder %s88, %s90
      %p94 = scmp.eq.s32.totalorder %s33, 0
      %p95 = por %p93, %p94
      %p96 = scmp.ne.s32.totalorder %s88, %s90
      %p97 = scmp.eq.s32.totalorder %s38, 1
      %p98 = por %p96, %p97
      %p99 = scmp.ne.s32.totalorder %s90, %s91
      %p100 = scmp.eq.s32.totalorder %s38, 0
      %p101 = por %p99, %p100
      %p102 = scmp.ne.s32.totalorder %s90, %s91
      %p103 = scmp.eq.s32.totalorder %s39, 1
      %p104 = por %p102, %p103
      %p106 = scmp.ne.s32.totalorder %s91, %s105
      %p107 = scmp.eq.s32.totalorder %s39, 0
      %p108 = por %p106, %p107
      %s110 = sadd.s32 %s109, 1
      %p113 = scmp.eq.s32.totalorder %s33, 1
      %p114 = scmp.ne.s32.totalorder %s109, %s111
      %p115 = scmp.eq.s32.totalorder %s33, 0
      %p116 = por %p114, %p115
      %p117 = scmp.ne.s32.totalorder %s109, %s111
      %p118 = scmp.eq.s32.totalorder %s38, 1
      %p119 = por %p117, %p118
      %p120 = scmp.ne.s32.totalorder %s111, %s112
      %p121 = scmp.eq.s32.totalorder %s38, 0
      %p122 = por %p120, %p121
      %p123 = scmp.ne.s32.totalorder %s111, %s112
      %p124 = scmp.eq.s32.totalorder %s39, 1
      %p125 = por %p123, %p124
      %p127 = scmp.ne.s32.totalorder %s112, %s126
      %p128 = scmp.eq.s32.totalorder %s39, 0
      %p129 = por %p127, %p128
      %s131 = sadd.s32 %s130, 1
      %p134 = scmp.eq.s32.totalorder %s33, 1
      %p135 = scmp.ne.s32.totalorder %s130, %s132
      %p136 = scmp.eq.s32.totalorder %s33, 0
      %p137 = por %p135, %p136
      %p138 = scmp.ne.s32.totalorder %s130, %s132
      %p139 = scmp.eq.s32.totalorder %s38, 1
      %p140 = por %p138, %p139
      %p141 = scmp.ne.s32.totalorder %s132, %s133
      %p142 = scmp.eq.s32.totalorder %s38, 0
      %p143 = por %p141, %p142
      %p144 = scmp.ne.s32.totalorder %s132, %s133
      %p145 = scmp.eq.s32.totalorder %s39, 1
      %p146 = por %p144, %p145
      %p148 = scmp.ne.s32.totalorder %s133, %s147
      %p149 = scmp.eq.s32.totalorder %s39, 0
      %p150 = por %p148, %p149
      %s152 = sadd.s32 %s151, 1
      %p155 = scmp.eq.s32.totalorder %s33, 1
      %p156 = scmp.ne.s32.totalorder %s151, %s153
      %p157 = scmp.eq.s32.totalorder %s33, 0
      %p158 = por %p156, %p157
      %p159 = scmp.ne.s32.totalorder %s151, %s153
      %p160 = scmp.eq.s32.totalorder %s38, 1
      %p161 = por %p159, %p160
      %p162 = scmp.ne.s32.totalorder %s153, %s154
      %p163 = scmp.eq.s32.totalorder %s38, 0
      %p164 = por %p162, %p163
      %p165 = scmp.ne.s32.totalorder %s153, %s154
      %p166 = scmp.eq.s32.totalorder %s39, 1
      %p167 = por %p165, %p166
      %p169 = scmp.ne.s32.totalorder %s154, %s168
      %p170 = scmp.eq.s32.totalorder %s39, 0
      %p171 = por %p169, %p170
      %s173 = sadd.s32 %s172, 1
      %p176 = scmp.eq.s32.totalorder %s33, 1
      %p177 = scmp.ne.s32.totalorder %s172, %s174
      %p178 = scmp.eq.s32.totalorder %s33, 0
      %p179 = por %p177, %p178
      %p180 = scmp.ne.s32.totalorder %s172, %s174
      %p181 = scmp.eq.s32.totalorder %s38, 1
      %p182 = por %p180, %p181
      %p183 = scmp.ne.s32.totalorder %s174, %s175
      %p184 = scmp.eq.s32.totalorder %s38, 0
      %p185 = por %p183, %p184
      %p186 = scmp.ne.s32.totalorder %s174, %s175
      %p187 = scmp.eq.s32.totalorder %s39, 1
      %p188 = por %p186, %p187
      %p190 = scmp.ne.s32.totalorder %s175, %s189
      %p191 = scmp.eq.s32.totalorder %s39, 0
      %p192 = por %p190, %p191
      %s194 = sadd.s32 %s193, 1
      %p197 = scmp.eq.s32.totalorder %s33, 1
      %p198 = scmp.ne.s32.totalorder %s193, %s195
      %p199 = scmp.eq.s32.totalorder %s33, 0
      %p200 = por %p198, %p199
      %p201 = scmp.ne.s32.totalorder %s193, %s195
      %p202 = scmp.eq.s32.totalorder %s38, 1
      %p203 = por %p201, %p202
      %p204 = scmp.ne.s32.totalorder %s195, %s196
      %p205 = scmp.eq.s32.totalorder %s38, 0
      %p206 = por %p204, %p205
      %p207 = scmp.ne.s32.totalorder %s195, %s196
      %p208 = scmp.eq.s32.totalorder %s39, 1
      %p209 = por %p207, %p208
      %p211 = scmp.ne.s32.totalorder %s196, %s210
      %p212 = scmp.eq.s32.totalorder %s39, 0
      %p213 = por %p211, %p212
      %s215 = sadd.s32 %s214, 1
      %p218 = scmp.eq.s32.totalorder %s33, 1
      %p219 = scmp.ne.s32.totalorder %s214, %s216
      %p220 = scmp.eq.s32.totalorder %s33, 0
      %p221 = por %p219, %p220
      %p222 = scmp.ne.s32.totalorder %s214, %s216
      %p223 = scmp.eq.s32.totalorder %s38, 1
      %p224 = por %p222, %p223
      %p225 = scmp.ne.s32.totalorder %s216, %s217
      %p226 = scmp.eq.s32.totalorder %s38, 0
      %p227 = por %p225, %p226
      %p228 = scmp.ne.s32.totalorder %s216, %s217
      %p229 = scmp.eq.s32.totalorder %s39, 1
      %p230 = por %p228, %p229
      %p232 = scmp.ne.s32.totalorder %s217, %s231
      %p233 = scmp.eq.s32.totalorder %s39, 0
      %p234 = por %p232, %p233
      %s236 = sadd.s32 %s235, 1
      %p239 = scmp.eq.s32.totalorder %s33, 1
      %p240 = scmp.ne.s32.totalorder %s235, %s237
      %p241 = scmp.eq.s32.totalorder %s33, 0
      %p242 = por %p240, %p241
      %p243 = scmp.ne.s32.totalorder %s235, %s237
      %p244 = scmp.eq.s32.totalorder %s38, 1
      %p245 = por %p243, %p244
      %p246 = scmp.ne.s32.totalorder %s237, %s238
      %p247 = scmp.eq.s32.totalorder %s38, 0
      %p248 = por %p246, %p247
      %p249 = scmp.ne.s32.totalorder %s237, %s238
      %p250 = scmp.eq.s32.totalorder %s39, 1
      %p251 = por %p249, %p250
      %p253 = scmp.ne.s32.totalorder %s238, %s252
      %p254 = scmp.eq.s32.totalorder %s39, 0
      %p255 = por %p253, %p254
      %s257 = sadd.s32 %s256, 1
      %p260 = scmp.eq.s32.totalorder %s33, 1
      %p261 = scmp.ne.s32.totalorder %s256, %s258
      %p262 = scmp.eq.s32.totalorder %s33, 0
      %p263 = por %p261, %p262
      %p264 = scmp.ne.s32.totalorder %s256, %s258
      %p265 = scmp.eq.s32.totalorder %s38, 1
      %p266 = por %p264, %p265
      %p267 = scmp.ne.s32.totalorder %s258, %s259
      %p268 = scmp.eq.s32.totalorder %s38, 0
      %p269 = por %p267, %p268
      %p270 = scmp.ne.s32.totalorder %s258, %s259
      %p271 = scmp.eq.s32.totalorder %s39, 1
      %p272 = por %p270, %p271
      %p274 = scmp.ne.s32.totalorder %s259, %s273
      %p275 = scmp.eq.s32.totalorder %s39, 0
      %p276 = por %p274, %p275
      %s278 = sadd.s32 %s277, 1
      %p281 = scmp.eq.s32.totalorder %s33, 1
      %p282 = scmp.ne.s32.totalorder %s277, %s279
      %p283 = scmp.eq.s32.totalorder %s33, 0
      %p284 = por %p282, %p283
      %p285 = scmp.ne.s32.totalorder %s277, %s279
      %p286 = scmp.eq.s32.totalorder %s38, 1
      %p287 = por %p285, %p286
      %p288 = scmp.ne.s32.totalorder %s279, %s280
      %p289 = scmp.eq.s32.totalorder %s38, 0
      %p290 = por %p288, %p289
      %p291 = scmp.ne.s32.totalorder %s279, %s280
      %p292 = scmp.eq.s32.totalorder %s39, 1
      %p293 = por %p291, %p292
      %p295 = scmp.ne.s32.totalorder %s280, %s294
      %p296 = scmp.eq.s32.totalorder %s39, 0
      %p297 = por %p295, %p296
      %s299 = sadd.s32 %s298, 1
      %p302 = scmp.eq.s32.totalorder %s33, 1
      %p303 = scmp.ne.s32.totalorder %s298, %s300
      %p304 = scmp.eq.s32.totalorder %s33, 0
      %p305 = por %p303, %p304
      %p306 = scmp.ne.s32.totalorder %s298, %s300
      %p307 = scmp.eq.s32.totalorder %s38, 1
      %p308 = por %p306, %p307
      %p309 = scmp.ne.s32.totalorder %s300, %s301
      %p310 = scmp.eq.s32.totalorder %s38, 0
      %p311 = por %p309, %p310
      %p312 = scmp.ne.s32.totalorder %s300, %s301
      %p313 = scmp.eq.s32.totalorder %s39, 1
      %p314 = por %p312, %p313
      %p316 = scmp.ne.s32.totalorder %s301, %s315
      %p317 = scmp.eq.s32.totalorder %s39, 0
      %p318 = por %p316, %p317
      %s320 = sadd.s32 %s319, 1
      %p323 = scmp.eq.s32.totalorder %s33, 1
      %p324 = scmp.ne.s32.totalorder %s319, %s321
      %p325 = scmp.eq.s32.totalorder %s33, 0
      %p326 = por %p324, %p325
      %p327 = scmp.ne.s32.totalorder %s319, %s321
      %p328 = scmp.eq.s32.totalorder %s38, 1
      %p329 = por %p327, %p328
      %p330 = scmp.ne.s32.totalorder %s321, %s322
      %p331 = scmp.eq.s32.totalorder %s38, 0
      %p332 = por %p330, %p331
      %p333 = scmp.ne.s32.totalorder %s321, %s322
      %p334 = scmp.eq.s32.totalorder %s39, 1
      %p335 = por %p333, %p334
      %p337 = scmp.ne.s32.totalorder %s322, %s336
      %p338 = scmp.eq.s32.totalorder %s39, 0
      %p339 = por %p337, %p338
      %s341 = sadd.s32 %s340, 1
      %p344 = scmp.eq.s32.totalorder %s33, 1
      %p345 = scmp.ne.s32.totalorder %s340, %s342
      %p346 = scmp.eq.s32.totalorder %s33, 0
      %p347 = por %p345, %p346
      %p348 = scmp.ne.s32.totalorder %s340, %s342
      %p349 = scmp.eq.s32.totalorder %s38, 1
      %p350 = por %p348, %p349
      %p351 = scmp.ne.s32.totalorder %s342, %s343
      %p352 = scmp.eq.s32.totalorder %s38, 0
      %p353 = por %p351, %p352
      %p354 = scmp.ne.s32.totalorder %s342, %s343
      %p355 = scmp.eq.s32.totalorder %s39, 1
      %p356 = por %p354, %p355
      %p358 = scmp.ne.s32.totalorder %s343, %s357
      %p359 = scmp.eq.s32.totalorder %s39, 0
      %p360 = por %p358, %p359
      %s361 = ssub.s32 %s33, %s40
      %p362 = scmp.eq.s32.totalorder %s361, 0
      %s364 = sadd.s32 %s363, 1
      %s365 = scalar_select %p362, %s363, %s364
      %p368 = pneg %p362
      %p369 = scmp.eq.s32.totalorder %s33, 1
      %p370 = por %p368, %p369
      %p371 = scmp.ne.s32.totalorder %s363, %s366
      %p372 = scmp.eq.s32.totalorder %s33, 0
      %p373 = por %p371, %p372
      %p374 = scmp.ne.s32.totalorder %s363, %s366
      %p375 = scmp.eq.s32.totalorder %s38, 1
      %p376 = por %p374, %p375
      %p377 = scmp.ne.s32.totalorder %s366, %s367
      %p378 = scmp.eq.s32.totalorder %s38, 0
      %p379 = por %p377, %p378
      %p380 = scmp.ne.s32.totalorder %s366, %s367
      %p381 = scmp.eq.s32.totalorder %s39, 1
      %p382 = por %p380, %p381
      %p384 = scmp.ne.s32.totalorder %s367, %s383
      %p385 = scmp.eq.s32.totalorder %s39, 0
      %p386 = por %p384, %p385
      %s387 = ssub.s32 %s33, %s40
      %p388 = scmp.eq.s32.totalorder %s387, 0
      %s390 = sadd.s32 %s389, 1
      %s391 = scalar_select %p388, %s389, %s390
      %p394 = pneg %p388
      %p395 = scmp.eq.s32.totalorder %s33, 1
      %p396 = por %p394, %p395
      %p397 = scmp.ne.s32.totalorder %s389, %s392
      %p398 = scmp.eq.s32.totalorder %s33, 0
      %p399 = por %p397, %p398
      %p400 = scmp.ne.s32.totalorder %s389, %s392
      %p401 = scmp.eq.s32.totalorder %s38, 1
      %p402 = por %p400, %p401
      %p403 = scmp.ne.s32.totalorder %s392, %s393
      %p404 = scmp.eq.s32.totalorder %s38, 0
      %p405 = por %p403, %p404
      %p406 = scmp.ne.s32.totalorder %s392, %s393
      %p407 = scmp.eq.s32.totalorder %s39, 1
      %p408 = por %p406, %p407
      %p410 = scmp.ne.s32.totalorder %s393, %s409
      %p411 = scmp.eq.s32.totalorder %s39, 0
      %p412 = por %p410, %p411
      %s413 = ssub.s32 %s33, %s40
      %p414 = scmp.eq.s32.totalorder %s413, 0
      %s416 = sadd.s32 %s415, 1
      %s417 = scalar_select %p414, %s415, %s416
      %p420 = pneg %p414
      %p421 = scmp.eq.s32.totalorder %s33, 1
      %p422 = por %p420, %p421
      %p423 = scmp.ne.s32.totalorder %s415, %s418
      %p424 = scmp.eq.s32.totalorder %s33, 0
      %p425 = por %p423, %p424
      %p426 = scmp.ne.s32.totalorder %s415, %s418
      %p427 = scmp.eq.s32.totalorder %s38, 1
      %p428 = por %p426, %p427
      %p429 = scmp.ne.s32.totalorder %s418, %s419
      %p430 = scmp.eq.s32.totalorder %s38, 0
      %p431 = por %p429, %p430
      %p432 = scmp.ne.s32.totalorder %s418, %s419
      %p433 = scmp.eq.s32.totalorder %s39, 1
      %p434 = por %p432, %p433
      %p436 = scmp.ne.s32.totalorder %s419, %s435
      %p437 = scmp.eq.s32.totalorder %s39, 0
      %p438 = por %p436, %p437
      %s439 = ssub.s32 %s33, %s40
      %p440 = scmp.eq.s32.totalorder %s439, 0
      %s442 = sadd.s32 %s441, 1
      %s443 = scalar_select %p440, %s441, %s442
      %p446 = pneg %p440
      %p447 = scmp.eq.s32.totalorder %s33, 1
      %p448 = por %p446, %p447
      %p449 = scmp.ne.s32.totalorder %s441, %s444
      %p450 = scmp.eq.s32.totalorder %s33, 0
      %p451 = por %p449, %p450
      %p452 = scmp.ne.s32.totalorder %s441, %s444
      %p453 = scmp.eq.s32.totalorder %s38, 1
      %p454 = por %p452, %p453
      %p455 = scmp.ne.s32.totalorder %s444, %s445
      %p456 = scmp.eq.s32.totalorder %s38, 0
      %p457 = por %p455, %p456
      %p458 = scmp.ne.s32.totalorder %s444, %s445
      %p459 = scmp.eq.s32.totalorder %s39, 1
      %p460 = por %p458, %p459
      %p462 = scmp.ne.s32.totalorder %s445, %s461
      %p463 = scmp.eq.s32.totalorder %s39, 0
      %p464 = por %p462, %p463
      %p465 = scmp.le.s32.totalorder 1, %s33
      %p466 = scmp.lt.s32.totalorder %s33, 3
      %p467 = pnand %p465, %p466
      %p468 = pneg %p467
      // Predicated region
      $region9: #{tpu_custom_call.1} parent=5 // pred_check
        _
      $region10: #{tpu_custom_call.1} parent=5 // pred_check_branch
        %470 = sbr.rel (%p467) target = $region12
      $region11: #{tpu_custom_call.1} parent=5 // pred_region
        %s471 = ssub.s32 %s33, 1
        // Predicated region
        $region13: #{tpu_custom_call.1} parent=11 // pred_check
          %p472 = pneg %p80
        $region14: #{tpu_custom_call.1} parent=11 // pred_check_branch
          %474 = sbr.rel (%p472) target = $region16
        $region15: #{tpu_custom_call.1} parent=11 // pred_region
          _
        $region16: #{tpu_custom_call.1} parent=11 // pred_fallthru
          _
        // Predicated region
        $region17: #{tpu_custom_call.1} parent=11 // pred_check
          %p475 = pneg %p101
        $region18: #{tpu_custom_call.1} parent=11 // pred_check_branch
          %477 = sbr.rel (%p475) target = $region20
        $region19: #{tpu_custom_call.1} parent=11 // pred_region
          _
        $region20: #{tpu_custom_call.1} parent=11 // pred_fallthru
          _
        // Predicated region
        $region21: #{tpu_custom_call.1} parent=11 // pred_check
          %p478 = pneg %p122
        $region22: #{tpu_custom_call.1} parent=11 // pred_check_branch
          %480 = sbr.rel (%p478) target = $region24
        $region23: #{tpu_custom_call.1} parent=11 // pred_region
          _
        $region24: #{tpu_custom_call.1} parent=11 // pred_fallthru
          _
        // Predicated region
        $region25: #{tpu_custom_call.1} parent=11 // pred_check
          %p481 = pneg %p143
        $region26: #{tpu_custom_call.1} parent=11 // pred_check_branch
          %483 = sbr.rel (%p481) target = $region28
        $region27: #{tpu_custom_call.1} parent=11 // pred_region
          _
        $region28: #{tpu_custom_call.1} parent=11 // pred_fallthru
          _
        // Predicated region
        $region29: #{tpu_custom_call.1} parent=11 // pred_check
          %p484 = pneg %p164
        $region30: #{tpu_custom_call.1} parent=11 // pred_check_branch
          %486 = sbr.rel (%p484) target = $region32
        $region31: #{tpu_custom_call.1} parent=11 // pred_region
          _
        $region32: #{tpu_custom_call.1} parent=11 // pred_fallthru
          _
        // Predicated region
        $region33: #{tpu_custom_call.1} parent=11 // pred_check
          %p487 = pneg %p185
        $region34: #{tpu_custom_call.1} parent=11 // pred_check_branch
          %489 = sbr.rel (%p487) target = $region36
        $region35: #{tpu_custom_call.1} parent=11 // pred_region
          _
        $region36: #{tpu_custom_call.1} parent=11 // pred_fallthru
          _
        // Predicated region
        $region37: #{tpu_custom_call.1} parent=11 // pred_check
          %p490 = pneg %p206
        $region38: #{tpu_custom_call.1} parent=11 // pred_check_branch
          %492 = sbr.rel (%p490) target = $region40
        $region39: #{tpu_custom_call.1} parent=11 // pred_region
          _
        $region40: #{tpu_custom_call.1} parent=11 // pred_fallthru
          _
        // Predicated region
        $region41: #{tpu_custom_call.1} parent=11 // pred_check
          %p493 = pneg %p227
        $region42: #{tpu_custom_call.1} parent=11 // pred_check_branch
          %495 = sbr.rel (%p493) target = $region44
        $region43: #{tpu_custom_call.1} parent=11 // pred_region
          _
        $region44: #{tpu_custom_call.1} parent=11 // pred_fallthru
          _
        // Predicated region
        $region45: #{tpu_custom_call.1} parent=11 // pred_check
          %p496 = pneg %p248
        $region46: #{tpu_custom_call.1} parent=11 // pred_check_branch
          %498 = sbr.rel (%p496) target = $region48
        $region47: #{tpu_custom_call.1} parent=11 // pred_region
          _
        $region48: #{tpu_custom_call.1} parent=11 // pred_fallthru
          _
        // Predicated region
        $region49: #{tpu_custom_call.1} parent=11 // pred_check
          %p499 = pneg %p269
        $region50: #{tpu_custom_call.1} parent=11 // pred_check_branch
          %501 = sbr.rel (%p499) target = $region52
        $region51: #{tpu_custom_call.1} parent=11 // pred_region
          _
        $region52: #{tpu_custom_call.1} parent=11 // pred_fallthru
          _
        // Predicated region
        $region53: #{tpu_custom_call.1} parent=11 // pred_check
          %p502 = pneg %p290
        $region54: #{tpu_custom_call.1} parent=11 // pred_check_branch
          %504 = sbr.rel (%p502) target = $region56
        $region55: #{tpu_custom_call.1} parent=11 // pred_region
          _
        $region56: #{tpu_custom_call.1} parent=11 // pred_fallthru
          _
        // Predicated region
        $region57: #{tpu_custom_call.1} parent=11 // pred_check
          %p505 = pneg %p311
        $region58: #{tpu_custom_call.1} parent=11 // pred_check_branch
          %507 = sbr.rel (%p505) target = $region60
        $region59: #{tpu_custom_call.1} parent=11 // pred_region
          _
        $region60: #{tpu_custom_call.1} parent=11 // pred_fallthru
          _
        // Predicated region
        $region61: #{tpu_custom_call.1} parent=11 // pred_check
          %p508 = pneg %p332
        $region62: #{tpu_custom_call.1} parent=11 // pred_check_branch
          %510 = sbr.rel (%p508) target = $region64
        $region63: #{tpu_custom_call.1} parent=11 // pred_region
          _
        $region64: #{tpu_custom_call.1} parent=11 // pred_fallthru
          _
        // Predicated region
        $region65: #{tpu_custom_call.1} parent=11 // pred_check
          %p511 = pneg %p353
        $region66: #{tpu_custom_call.1} parent=11 // pred_check_branch
          %513 = sbr.rel (%p511) target = $region68
        $region67: #{tpu_custom_call.1} parent=11 // pred_region
          _
        $region68: #{tpu_custom_call.1} parent=11 // pred_fallthru
          _
      $region12: #{tpu_custom_call.1} parent=5 // pred_fallthru
        _
      %p514 = scmp.lt.s32.totalorder %s33, 2
      // Predicated region
      $region69: #{tpu_custom_call.1} parent=5 // pred_check
        %p515 = pneg %p514
      $region70: #{tpu_custom_call.1} parent=5 // pred_check_branch
        %517 = sbr.rel (%p515) target = $region72
      $region71: #{tpu_custom_call.1} parent=5 // pred_region
        // Predicated region
        $region73: #{tpu_custom_call.1} parent=71 // pred_check
          %p518 = pneg %p53
        $region74: #{tpu_custom_call.1} parent=71 // pred_check_branch
          %520 = sbr.rel (%p518) target = $region76
        $region75: #{tpu_custom_call.1} parent=71 // pred_region
          %p521 = scmp.lt.s32.totalorder %s33, 1
          %s522 = scalar_select %p521, %s33, 1
          %s523 = smul.addr %s522, 16
          %s524 = smul.addr %s523, 4
          %s525 = scalar_lea.vmem %s0, %s524
        $region76: #{tpu_custom_call.1} parent=71 // pred_fallthru
          _
      $region72: #{tpu_custom_call.1} parent=5 // pred_fallthru
        _
      %p526 = scmp.le.s32.totalorder 1, %s33
      %p527 = scmp.lt.s32.totalorder %s33, 3
      %p528 = pnand %p526, %p527
      %p529 = pneg %p528
      // Predicated region
      $region77: #{tpu_custom_call.1} parent=5 // pred_check
        _
      $region78: #{tpu_custom_call.1} parent=5 // pred_check_branch
        %531 = sbr.rel (%p528) target = $region80
      $region79: #{tpu_custom_call.1} parent=5 // pred_region
        %s532 = ssub.s32 %s33, 1
        %p533 = scmp.lt.s32.totalorder %s38, 1
        %s534 = scalar_select %p533, %s38, 1
        %s535 = smul.addr %s534, 16
        %s536 = smul.addr %s535, 4
        %s537 = scalar_lea.vmem %s0, %s536
        %p538 = pneg %p59
        %p539 = pneg %p56
        %p540 = pneg %p80
        %p541 = pneg %p77
        %p542 = pneg %p101
        %p543 = pneg %p98
        %p544 = pneg %p122
        %p545 = pneg %p119
        %p546 = pneg %p143
        %p547 = pneg %p140
        %p548 = pneg %p164
        %p549 = pneg %p161
        %p550 = pneg %p185
        %p551 = pneg %p182
        %p552 = pneg %p206
        %p553 = pneg %p203
        %p554 = pneg %p227
        %p555 = pneg %p224
        %p556 = pneg %p248
        %p557 = pneg %p245
        %p558 = pneg %p269
        %p559 = pneg %p266
        %p560 = pneg %p290
        %p561 = pneg %p287
        %p562 = pneg %p311
        %p563 = pneg %p308
        %p564 = pneg %p332
        %p565 = pneg %p329
        %p566 = pneg %p353
        %p567 = pneg %p350
        %p568 = pneg %p379
        %p569 = pneg %p376
        %s570 = sand.u32 %s366, 1
        %s571 = scalar_lea.sflag [#allocation4], %s570
        %s572 = sand.u32 %s366, 1
        %s573 = smul.addr %s572, 128
        %s574 = scalar_lea.vmem [#allocation3], %s573
        %p575 = pneg %p405
        %p576 = pneg %p402
        %s577 = sand.u32 %s392, 1
        %s578 = scalar_lea.sflag [#allocation6], %s577
        %s579 = sand.u32 %s392, 1
        %s580 = smul.addr %s579, 128
        %s581 = scalar_lea.vmem [#allocation5], %s580
        %p582 = pneg %p431
        %p583 = pneg %p428
        %p584 = scmp.lt.s32.totalorder %s38, 1
        %s585 = scalar_select %p584, %s38, 1
        %s586 = smul.addr %s585, 16
        %s587 = smul.addr %s586, 4
        %s588 = scalar_lea.vmem %s17, %s587
        %p589 = pneg %p457
        %p590 = pneg %p454
        %p591 = scmp.lt.s32.totalorder %s38, 1
        %s592 = scalar_select %p591, %s38, 1
        %s593 = smul.addr %s592, 16
        %s594 = smul.addr %s593, 4
        %s595 = scalar_lea.vmem %s18, %s594
        %p596 = scmp.lt.s32.totalorder %s38, 1
        %s597 = scalar_select %p596, %s38, 1
        %s598 = smul.addr %s597, 16
        %s599 = smul.addr %s598, 4
        %s600 = scalar_lea.vmem %s0, %s599
        %p601 = scmp.lt.s32.totalorder %s38, 1
        %s602 = scalar_select %p601, %s38, 1
        %s603 = smul.addr %s602, 16
        %s604 = smul.addr %s603, 4
        %s605 = scalar_lea.vmem %s17, %s604
        %p606 = scmp.lt.s32.totalorder %s38, 1
        %s607 = scalar_select %p606, %s38, 1
        %s608 = smul.addr %s607, 16
        %s609 = smul.addr %s608, 4
        %s610 = scalar_lea.vmem %s18, %s609
        %v612 = vld [vmem:[%s600] sm:$0xf]
        %v613 = vld [vmem:[%s600 + $0x4] sm:$0xf]
        %v614 = vld [vmem:[%s600 + $0x8] sm:$0xf]
        %v615 = vld [vmem:[%s600 + $0xc] sm:$0xf]
        %v616 = vld [vmem:[%s600 + $0x10] sm:$0xf]
        %v617 = vld [vmem:[%s600 + $0x14] sm:$0xf]
        %v618 = vld [vmem:[%s600 + $0x18] sm:$0xf]
        %v619 = vld [vmem:[%s600 + $0x1c] sm:$0xf]
        %v620 = vld [vmem:[%s600 + $0x20] sm:$0xf]
        %v621 = vld [vmem:[%s600 + $0x24] sm:$0xf]
        %v622 = vld [vmem:[%s600 + $0x28] sm:$0xf]
        %v623 = vld [vmem:[%s600 + $0x2c] sm:$0xf]
        %v624 = vld [vmem:[%s600 + $0x30] sm:$0xf]
        %v625 = vld [vmem:[%s600 + $0x34] sm:$0xf]
        %v626 = vld [vmem:[%s600 + $0x38] sm:$0xf]
        %v627 = vld [vmem:[%s600 + $0x3c] sm:$0xf]
        %v628 = vld [vmem:[%s1] sm:$0xff]
        %v629 = vld [vmem:[%s1 + $0x8] sm:$0xff]
        %v630 = vld [vmem:[%s1 + $0x10] sm:$0xff]
        %v631 = vld [vmem:[%s1 + $0x18] sm:$0xff]
        %v632 = vld [vmem:[%s2] sm:$0x3]
        %v634 = vperm.slane %v632, 0
        %v635 = vperm.slane %v632, 1
        %v654 = vunpack.c.l.b16 %v612
        %v655 = vunpack.c.l.b16 %v613
        %v656 = vunpack.c.l.b16 %v614
        %v657 = vunpack.c.l.b16 %v615
        %v658 = vunpack.c.l.b16 %v616
        %v659 = vunpack.c.l.b16 %v617
        %v660 = vunpack.c.l.b16 %v618
        %v661 = vunpack.c.l.b16 %v619
        %v662 = vunpack.c.l.b16 %v620
        %v663 = vunpack.c.l.b16 %v621
        %v664 = vunpack.c.l.b16 %v622
        %v665 = vunpack.c.l.b16 %v623
        %v666 = vunpack.c.l.b16 %v624
        %v667 = vunpack.c.l.b16 %v625
        %v668 = vunpack.c.l.b16 %v626
        %v669 = vunpack.c.l.b16 %v627
        %v670 = vpack.c.b16 %v655, %v654
        %v671 = vpack.c.b16 %v657, %v656
        %v672 = vpack.c.b16 %v659, %v658
        %v673 = vpack.c.b16 %v661, %v660
        %v674 = vpack.c.b16 %v663, %v662
        %v675 = vpack.c.b16 %v665, %v664
        %v676 = vpack.c.b16 %v667, %v666
        %v677 = vpack.c.b16 %v669, %v668
        %v682 = vunpack.c.l.b16 %v628
        %v683 = vunpack.c.h.b16 %v628
        %v684 = vunpack.c.l.b16 %v629
        %v685 = vunpack.c.h.b16 %v629
        %v686 = vunpack.c.l.b16 %v630
        %v687 = vunpack.c.h.b16 %v630
        %v688 = vunpack.c.l.b16 %v631
        %v689 = vunpack.c.h.b16 %v631
        %v690 = vpack.c.b16 %v684, %v682
        %v691 = vpack.c.b16 %v685, %v683
        %v692 = vpack.c.b16 %v688, %v686
        %v693 = vpack.c.b16 %v689, %v687
        %vm698 = vcmask 261120
        %v700 = vsel %vm698, %v670, 0
        %v703 = vsel %vm698, %v671, 0
        %v706 = vsel %vm698, %v672, 0
        %v709 = vsel %vm698, %v673, 0
        %v712 = vsel %vm698, %v674, 0
        %v715 = vsel %vm698, %v675, 0
        %v718 = vsel %vm698, %v676, 0
        %v721 = vsel %vm698, %v677, 0
        %723 = vmatpush.bf16.msra.mxu0 0
        %724 = vmatpush.bf16.msra.mxu0 0
        %725 = vmatpush.bf16.msra.mxu0 0
        %726 = vmatpush.bf16.msra.mxu0 0
        %727 = vmatpush.bf16.msra.mxu0 0
        %728 = vmatpush.bf16.msra.mxu0 0
        %729 = vmatpush.bf16.msra.mxu0 %v692
        %730 = vmatpush.bf16.msra.mxu0 %v690
        %731 = vmatmul.bf16.gmra.mxu0 %v700
        %v732 = vpop.f32.mrf.mxu0
        %v733 = vadd.f32 %v634, %v732
        %v734 = vpop.f32.mrf.mxu0
        %v735 = vadd.f32 %v634, %v734
        %736 = vmatmul.bf16.gmra.mxu0 %v703
        %v737 = vpop.f32.mrf.mxu0
        %v738 = vadd.f32 %v634, %v737
        %v739 = vpop.f32.mrf.mxu0
        %v740 = vadd.f32 %v634, %v739
        %741 = vmatmul.bf16.gmra.mxu0 %v706
        %v742 = vpop.f32.mrf.mxu0
        %v743 = vadd.f32 %v634, %v742
        %v744 = vpop.f32.mrf.mxu0
        %v745 = vadd.f32 %v634, %v744
        %746 = vmatmul.bf16.gmra.mxu0 %v709
        %v747 = vpop.f32.mrf.mxu0
        %v748 = vadd.f32 %v634, %v747
        %v749 = vpop.f32.mrf.mxu0
        %v750 = vadd.f32 %v634, %v749
        %751 = vmatmul.bf16.gmra.mxu0 %v712
        %v752 = vpop.f32.mrf.mxu0
        %v753 = vadd.f32 %v634, %v752
        %v754 = vpop.f32.mrf.mxu0
        %v755 = vadd.f32 %v634, %v754
        %756 = vmatmul.bf16.gmra.mxu0 %v715
        %v757 = vpop.f32.mrf.mxu0
        %v758 = vadd.f32 %v634, %v757
        %v759 = vpop.f32.mrf.mxu0
        %v760 = vadd.f32 %v634, %v759
        %761 = vmatmul.bf16.gmra.mxu0 %v718
        %v762 = vpop.f32.mrf.mxu0
        %v763 = vadd.f32 %v634, %v762
        %v764 = vpop.f32.mrf.mxu0
        %v765 = vadd.f32 %v634, %v764
        %766 = vmatmul.bf16.gmra.mxu0 %v721
        %v767 = vpop.f32.mrf.mxu0
        %v768 = vadd.f32 %v634, %v767
        %v769 = vpop.f32.mrf.mxu0
        %v770 = vadd.f32 %v634, %v769
        %771 = vdwg.mxu0
        %772 = vmatpush.bf16.msra.mxu0 0
        %773 = vmatpush.bf16.msra.mxu0 0
        %774 = vmatpush.bf16.msra.mxu0 0
        %775 = vmatpush.bf16.msra.mxu0 0
        %776 = vmatpush.bf16.msra.mxu0 0
        %777 = vmatpush.bf16.msra.mxu0 0
        %778 = vmatpush.bf16.msra.mxu0 %v693
        %779 = vmatpush.bf16.msra.mxu0 %v691
        %780 = vmatmul.bf16.gmra.mxu0 %v700
        %v781 = vpop.f32.mrf.mxu0
        %v782 = vadd.f32 %v635, %v781
        %v783 = vpop.f32.mrf.mxu0
        %v784 = vadd.f32 %v635, %v783
        %785 = vmatmul.bf16.gmra.mxu0 %v703
        %v786 = vpop.f32.mrf.mxu0
        %v787 = vadd.f32 %v635, %v786
        %v788 = vpop.f32.mrf.mxu0
        %v789 = vadd.f32 %v635, %v788
        %790 = vmatmul.bf16.gmra.mxu0 %v706
        %v791 = vpop.f32.mrf.mxu0
        %v792 = vadd.f32 %v635, %v791
        %v793 = vpop.f32.mrf.mxu0
        %v794 = vadd.f32 %v635, %v793
        %795 = vmatmul.bf16.gmra.mxu0 %v709
        %v796 = vpop.f32.mrf.mxu0
        %v797 = vadd.f32 %v635, %v796
        %v798 = vpop.f32.mrf.mxu0
        %v799 = vadd.f32 %v635, %v798
        %800 = vmatmul.bf16.gmra.mxu0 %v712
        %v801 = vpop.f32.mrf.mxu0
        %v802 = vadd.f32 %v635, %v801
        %v803 = vpop.f32.mrf.mxu0
        %v804 = vadd.f32 %v635, %v803
        %805 = vmatmul.bf16.gmra.mxu0 %v715
        %v806 = vpop.f32.mrf.mxu0
        %v807 = vadd.f32 %v635, %v806
        %v808 = vpop.f32.mrf.mxu0
        %v809 = vadd.f32 %v635, %v808
        %810 = vmatmul.bf16.gmra.mxu0 %v718
        %v811 = vpop.f32.mrf.mxu0
        %v812 = vadd.f32 %v635, %v811
        %v813 = vpop.f32.mrf.mxu0
        %v814 = vadd.f32 %v635, %v813
        %815 = vmatmul.bf16.gmra.mxu0 %v721
        %v816 = vpop.f32.mrf.mxu0
        %v817 = vadd.f32 %v635, %v816
        %v818 = vpop.f32.mrf.mxu0
        %v819 = vadd.f32 %v635, %v818
        %820 = vdwg.mxu0
        %821 = vst [vmem:[%s574] sm:$0xff] %v733
        %822 = vst [vmem:[%s574 + $0x8] sm:$0xff] %v735
        %823 = vst [vmem:[%s574 + $0x10] sm:$0xff] %v738
        %824 = vst [vmem:[%s574 + $0x18] sm:$0xff] %v740
        %825 = vst [vmem:[%s574 + $0x20] sm:$0xff] %v743
        %826 = vst [vmem:[%s574 + $0x28] sm:$0xff] %v745
        %827 = vst [vmem:[%s574 + $0x30] sm:$0xff] %v748
        %828 = vst [vmem:[%s574 + $0x38] sm:$0xff] %v750
        %829 = vst [vmem:[%s574 + $0x40] sm:$0xff] %v753
        %830 = vst [vmem:[%s574 + $0x48] sm:$0xff] %v755
        %831 = vst [vmem:[%s574 + $0x50] sm:$0xff] %v758
        %832 = vst [vmem:[%s574 + $0x58] sm:$0xff] %v760
        %833 = vst [vmem:[%s574 + $0x60] sm:$0xff] %v763
        %834 = vst [vmem:[%s574 + $0x68] sm:$0xff] %v765
        %835 = vst [vmem:[%s574 + $0x70] sm:$0xff] %v768
        %836 = vst [vmem:[%s574 + $0x78] sm:$0xff] %v770
        %v837 = vpack.c.bf16 %v784, %v782
        %v838 = vpack.c.bf16 %v789, %v787
        %v839 = vpack.c.bf16 %v794, %v792
        %v840 = vpack.c.bf16 %v799, %v797
        %v841 = vpack.c.bf16 %v804, %v802
        %v842 = vpack.c.bf16 %v809, %v807
        %v843 = vpack.c.bf16 %v814, %v812
        %v844 = vpack.c.bf16 %v819, %v817
        %v845 = vld [vmem:[%s3] sm:$0xf]
        %v846 = vld [vmem:[%s4] sm:$0x1]
        %v848 = vperm.slane %v846, 0
        %vm850 = vcmask 64512
        %v852 = vsel %vm850, %v837, 0
        %v855 = vsel %vm850, %v838, 0
        %v858 = vsel %vm850, %v839, 0
        %v861 = vsel %vm850, %v840, 0
        %v864 = vsel %vm850, %v841, 0
        %v867 = vsel %vm850, %v842, 0
        %v870 = vsel %vm850, %v843, 0
        %v873 = vsel %vm850, %v844, 0
        %vm875 = vcmask 1043456
        %v877 = vsel %vm875, %v845, 0
        %879 = vmatpush.bf16.msra.mxu0 0
        %880 = vmatpush.bf16.msra.mxu0 0
        %881 = vmatpush.bf16.msra.mxu0 0
        %882 = vmatpush.bf16.msra.mxu0 0
        %883 = vmatpush.bf16.msra.mxu0 0
        %884 = vmatpush.bf16.msra.mxu0 0
        %885 = vmatpush.bf16.msra.mxu0 0
        %886 = vmatpush.bf16.msra.mxu0 %v877
        %887 = vmatmul.bf16.gmra.mxu0 %v852
        %v888 = vpop.f32.mrf.mxu0
        %v889 = vadd.f32 %v848, %v888
        %v890 = vpop.f32.mrf.mxu0
        %v891 = vadd.f32 %v848, %v890
        %892 = vmatmul.bf16.gmra.mxu0 %v855
        %v893 = vpop.f32.mrf.mxu0
        %v894 = vadd.f32 %v848, %v893
        %v895 = vpop.f32.mrf.mxu0
        %v896 = vadd.f32 %v848, %v895
        %897 = vmatmul.bf16.gmra.mxu0 %v858
        %v898 = vpop.f32.mrf.mxu0
        %v899 = vadd.f32 %v848, %v898
        %v900 = vpop.f32.mrf.mxu0
        %v901 = vadd.f32 %v848, %v900
        %902 = vmatmul.bf16.gmra.mxu0 %v861
        %v903 = vpop.f32.mrf.mxu0
        %v904 = vadd.f32 %v848, %v903
        %v905 = vpop.f32.mrf.mxu0
        %v906 = vadd.f32 %v848, %v905
        %907 = vmatmul.bf16.gmra.mxu0 %v864
        %v908 = vpop.f32.mrf.mxu0
        %v909 = vadd.f32 %v848, %v908
        %v910 = vpop.f32.mrf.mxu0
        %v911 = vadd.f32 %v848, %v910
        %912 = vmatmul.bf16.gmra.mxu0 %v867
        %v913 = vpop.f32.mrf.mxu0
        %v914 = vadd.f32 %v848, %v913
        %v915 = vpop.f32.mrf.mxu0
        %v916 = vadd.f32 %v848, %v915
        %917 = vmatmul.bf16.gmra.mxu0 %v870
        %v918 = vpop.f32.mrf.mxu0
        %v919 = vadd.f32 %v848, %v918
        %v920 = vpop.f32.mrf.mxu0
        %v921 = vadd.f32 %v848, %v920
        %922 = vmatmul.bf16.gmra.mxu0 %v873
        %v923 = vpop.f32.mrf.mxu0
        %v924 = vadd.f32 %v848, %v923
        %v925 = vpop.f32.mrf.mxu0
        %v926 = vadd.f32 %v848, %v925
        %927 = vdwg.mxu0
        %v928 = vmax.f32 %v889, 0.0
        %v929 = vmax.f32 %v891, 0.0
        %v930 = vmax.f32 %v894, 0.0
        %v931 = vmax.f32 %v896, 0.0
        %v932 = vmax.f32 %v899, 0.0
        %v933 = vmax.f32 %v901, 0.0
        %v934 = vmax.f32 %v904, 0.0
        %v935 = vmax.f32 %v906, 0.0
        %v936 = vmax.f32 %v909, 0.0
        %v937 = vmax.f32 %v911, 0.0
        %v938 = vmax.f32 %v914, 0.0
        %v939 = vmax.f32 %v916, 0.0
        %v940 = vmax.f32 %v919, 0.0
        %v941 = vmax.f32 %v921, 0.0
        %v942 = vmax.f32 %v924, 0.0
        %v943 = vmax.f32 %v926, 0.0
        %v944 = vpack.c.bf16 %v929, %v928
        %v945 = vpack.c.bf16 %v931, %v930
        %v946 = vpack.c.bf16 %v933, %v932
        %v947 = vpack.c.bf16 %v935, %v934
        %v948 = vpack.c.bf16 %v937, %v936
        %v949 = vpack.c.bf16 %v939, %v938
        %v950 = vpack.c.bf16 %v941, %v940
        %v951 = vpack.c.bf16 %v943, %v942
        %v952 = vld [vmem:[%s5] sm:$0xf]
        %v953 = vld [vmem:[%s6] sm:$0x1]
        %v955 = vperm.slane %v953, 0
        %v958 = vsel %vm875, %v952, 0
        %960 = vmatpush.bf16.msra.mxu0 0
        %961 = vmatpush.bf16.msra.mxu0 0
        %962 = vmatpush.bf16.msra.mxu0 0
        %963 = vmatpush.bf16.msra.mxu0 0
        %964 = vmatpush.bf16.msra.mxu0 0
        %965 = vmatpush.bf16.msra.mxu0 0
        %966 = vmatpush.bf16.msra.mxu0 0
        %967 = vmatpush.bf16.msra.mxu0 %v958
        %968 = vmatmul.bf16.gmra.mxu0 %v852
        %v969 = vpop.f32.mrf.mxu0
        %v970 = vadd.f32 %v955, %v969
        %v971 = vpop.f32.mrf.mxu0
        %v972 = vadd.f32 %v955, %v971
        %973 = vmatmul.bf16.gmra.mxu0 %v855
        %v974 = vpop.f32.mrf.mxu0
        %v975 = vadd.f32 %v955, %v974
        %v976 = vpop.f32.mrf.mxu0
        %v977 = vadd.f32 %v955, %v976
        %978 = vmatmul.bf16.gmra.mxu0 %v858
        %v979 = vpop.f32.mrf.mxu0
        %v980 = vadd.f32 %v955, %v979
        %v981 = vpop.f32.mrf.mxu0
        %v982 = vadd.f32 %v955, %v981
        %983 = vmatmul.bf16.gmra.mxu0 %v861
        %v984 = vpop.f32.mrf.mxu0
        %v985 = vadd.f32 %v955, %v984
        %v986 = vpop.f32.mrf.mxu0
        %v987 = vadd.f32 %v955, %v986
        %988 = vmatmul.bf16.gmra.mxu0 %v864
        %v989 = vpop.f32.mrf.mxu0
        %v990 = vadd.f32 %v955, %v989
        %v991 = vpop.f32.mrf.mxu0
        %v992 = vadd.f32 %v955, %v991
        %993 = vmatmul.bf16.gmra.mxu0 %v867
        %v994 = vpop.f32.mrf.mxu0
        %v995 = vadd.f32 %v955, %v994
        %v996 = vpop.f32.mrf.mxu0
        %v997 = vadd.f32 %v955, %v996
        %998 = vmatmul.bf16.gmra.mxu0 %v870
        %v999 = vpop.f32.mrf.mxu0
        %v1000 = vadd.f32 %v955, %v999
        %v1001 = vpop.f32.mrf.mxu0
        %v1002 = vadd.f32 %v955, %v1001
        %1003 = vmatmul.bf16.gmra.mxu0 %v873
        %v1004 = vpop.f32.mrf.mxu0
        %v1005 = vadd.f32 %v955, %v1004
        %v1006 = vpop.f32.mrf.mxu0
        %v1007 = vadd.f32 %v955, %v1006
        %1008 = vdwg.mxu0
        %v1009 = vmax.f32 %v970, 0.0
        %v1010 = vmax.f32 %v972, 0.0
        %v1011 = vmax.f32 %v975, 0.0
        %v1012 = vmax.f32 %v977, 0.0
        %v1013 = vmax.f32 %v980, 0.0
        %v1014 = vmax.f32 %v982, 0.0
        %v1015 = vmax.f32 %v985, 0.0
        %v1016 = vmax.f32 %v987, 0.0
        %v1017 = vmax.f32 %v990, 0.0
        %v1018 = vmax.f32 %v992, 0.0
        %v1019 = vmax.f32 %v995, 0.0
        %v1020 = vmax.f32 %v997, 0.0
        %v1021 = vmax.f32 %v1000, 0.0
        %v1022 = vmax.f32 %v1002, 0.0
        %v1023 = vmax.f32 %v1005, 0.0
        %v1024 = vmax.f32 %v1007, 0.0
        %v1025 = vpack.c.bf16 %v1010, %v1009
        %v1026 = vpack.c.bf16 %v1012, %v1011
        %v1027 = vpack.c.bf16 %v1014, %v1013
        %v1028 = vpack.c.bf16 %v1016, %v1015
        %v1029 = vpack.c.bf16 %v1018, %v1017
        %v1030 = vpack.c.bf16 %v1020, %v1019
        %v1031 = vpack.c.bf16 %v1022, %v1021
        %v1032 = vpack.c.bf16 %v1024, %v1023
        %v1033 = vld [vmem:[%s7] sm:$0xf]
        %v1034 = vld [vmem:[%s9] sm:$0x1]
        %v1036 = vperm.slane %v1034, 0
        %v1039 = vsel %vm850, %v944, 0
        %v1042 = vsel %vm850, %v945, 0
        %v1045 = vsel %vm850, %v946, 0
        %v1048 = vsel %vm850, %v947, 0
        %v1051 = vsel %vm850, %v948, 0
        %v1054 = vsel %vm850, %v949, 0
        %v1057 = vsel %vm850, %v950, 0
        %v1060 = vsel %vm850, %v951, 0
        %v1063 = vsel %vm875, %v1033, 0
        %1065 = vmatpush.bf16.msra.mxu0 0
        %1066 = vmatpush.bf16.msra.mxu0 0
        %1067 = vmatpush.bf16.msra.mxu0 0
        %1068 = vmatpush.bf16.msra.mxu0 0
        %1069 = vmatpush.bf16.msra.mxu0 0
        %1070 = vmatpush.bf16.msra.mxu0 0
        %1071 = vmatpush.bf16.msra.mxu0 0
        %1072 = vmatpush.bf16.msra.mxu0 %v1063
        %1073 = vmatmul.bf16.gmra.mxu0 %v1039
        %v1074 = vpop.f32.mrf.mxu0
        %v1075 = vadd.f32 %v1036, %v1074
        %v1076 = vpop.f32.mrf.mxu0
        %v1077 = vadd.f32 %v1036, %v1076
        %1078 = vmatmul.bf16.gmra.mxu0 %v1042
        %v1079 = vpop.f32.mrf.mxu0
        %v1080 = vadd.f32 %v1036, %v1079
        %v1081 = vpop.f32.mrf.mxu0
        %v1082 = vadd.f32 %v1036, %v1081
        %1083 = vmatmul.bf16.gmra.mxu0 %v1045
        %v1084 = vpop.f32.mrf.mxu0
        %v1085 = vadd.f32 %v1036, %v1084
        %v1086 = vpop.f32.mrf.mxu0
        %v1087 = vadd.f32 %v1036, %v1086
        %1088 = vmatmul.bf16.gmra.mxu0 %v1048
        %v1089 = vpop.f32.mrf.mxu0
        %v1090 = vadd.f32 %v1036, %v1089
        %v1091 = vpop.f32.mrf.mxu0
        %v1092 = vadd.f32 %v1036, %v1091
        %1093 = vmatmul.bf16.gmra.mxu0 %v1051
        %v1094 = vpop.f32.mrf.mxu0
        %v1095 = vadd.f32 %v1036, %v1094
        %v1096 = vpop.f32.mrf.mxu0
        %v1097 = vadd.f32 %v1036, %v1096
        %1098 = vmatmul.bf16.gmra.mxu0 %v1054
        %v1099 = vpop.f32.mrf.mxu0
        %v1100 = vadd.f32 %v1036, %v1099
        %v1101 = vpop.f32.mrf.mxu0
        %v1102 = vadd.f32 %v1036, %v1101
        %1103 = vmatmul.bf16.gmra.mxu0 %v1057
        %v1104 = vpop.f32.mrf.mxu0
        %v1105 = vadd.f32 %v1036, %v1104
        %v1106 = vpop.f32.mrf.mxu0
        %v1107 = vadd.f32 %v1036, %v1106
        %1108 = vmatmul.bf16.gmra.mxu0 %v1060
        %v1109 = vpop.f32.mrf.mxu0
        %v1110 = vadd.f32 %v1036, %v1109
        %v1111 = vpop.f32.mrf.mxu0
        %v1112 = vadd.f32 %v1036, %v1111
        %1113 = vdwg.mxu0
        %v1114 = vpack.c.bf16 %v1077, %v1075
        %v1115 = vpack.c.bf16 %v1082, %v1080
        %v1116 = vpack.c.bf16 %v1087, %v1085
        %v1117 = vpack.c.bf16 %v1092, %v1090
        %v1118 = vpack.c.bf16 %v1097, %v1095
        %v1119 = vpack.c.bf16 %v1102, %v1100
        %v1120 = vpack.c.bf16 %v1107, %v1105
        %v1121 = vpack.c.bf16 %v1112, %v1110
        %v1122 = vld [vmem:[%s8] sm:$0xf]
        %v1123 = vld [vmem:[#allocation2] sm:$0x1]
        %v1125 = vperm.slane %v1123, 0
        %v1128 = vsel %vm875, %v1122, 0
        %1130 = vmatpush.bf16.msra.mxu0 0
        %1131 = vmatpush.bf16.msra.mxu0 0
        %1132 = vmatpush.bf16.msra.mxu0 0
        %1133 = vmatpush.bf16.msra.mxu0 0
        %1134 = vmatpush.bf16.msra.mxu0 0
        %1135 = vmatpush.bf16.msra.mxu0 0
        %1136 = vmatpush.bf16.msra.mxu0 0
        %1137 = vmatpush.bf16.msra.mxu0 %v1128
        %1138 = vmatmul.bf16.gmra.mxu0 %v1039
        %v1139 = vpop.f32.mrf.mxu0
        %v1140 = vadd.f32 %v1125, %v1139
        %v1141 = vpop.f32.mrf.mxu0
        %v1142 = vadd.f32 %v1125, %v1141
        %1143 = vmatmul.bf16.gmra.mxu0 %v1042
        %v1144 = vpop.f32.mrf.mxu0
        %v1145 = vadd.f32 %v1125, %v1144
        %v1146 = vpop.f32.mrf.mxu0
        %v1147 = vadd.f32 %v1125, %v1146
        %1148 = vmatmul.bf16.gmra.mxu0 %v1045
        %v1149 = vpop.f32.mrf.mxu0
        %v1150 = vadd.f32 %v1125, %v1149
        %v1151 = vpop.f32.mrf.mxu0
        %v1152 = vadd.f32 %v1125, %v1151
        %1153 = vmatmul.bf16.gmra.mxu0 %v1048
        %v1154 = vpop.f32.mrf.mxu0
        %v1155 = vadd.f32 %v1125, %v1154
        %v1156 = vpop.f32.mrf.mxu0
        %v1157 = vadd.f32 %v1125, %v1156
        %1158 = vmatmul.bf16.gmra.mxu0 %v1051
        %v1159 = vpop.f32.mrf.mxu0
        %v1160 = vadd.f32 %v1125, %v1159
        %v1161 = vpop.f32.mrf.mxu0
        %v1162 = vadd.f32 %v1125, %v1161
        %1163 = vmatmul.bf16.gmra.mxu0 %v1054
        %v1164 = vpop.f32.mrf.mxu0
        %v1165 = vadd.f32 %v1125, %v1164
        %v1166 = vpop.f32.mrf.mxu0
        %v1167 = vadd.f32 %v1125, %v1166
        %1168 = vmatmul.bf16.gmra.mxu0 %v1057
        %v1169 = vpop.f32.mrf.mxu0
        %v1170 = vadd.f32 %v1125, %v1169
        %v1171 = vpop.f32.mrf.mxu0
        %v1172 = vadd.f32 %v1125, %v1171
        %1173 = vmatmul.bf16.gmra.mxu0 %v1060
        %v1174 = vpop.f32.mrf.mxu0
        %v1175 = vadd.f32 %v1125, %v1174
        %v1176 = vpop.f32.mrf.mxu0
        %v1177 = vadd.f32 %v1125, %v1176
        %1178 = vdwg.mxu0
        %1180 = vset.pattern.permute.xlu0 0
        %1181 = vperm.xlu0 %1180, %v1140
        %v1182 = vpop.permute.xlu0 %1181
        %1185 = vset.pattern.permute.xlu0 0
        %1186 = vperm.xlu0 %1185, %v1142
        %v1187 = vpop.permute.xlu0 %1186
        %1190 = vset.pattern.permute.xlu0 0
        %1191 = vperm.xlu0 %1190, %v1145
        %v1192 = vpop.permute.xlu0 %1191
        %1195 = vset.pattern.permute.xlu0 0
        %1196 = vperm.xlu0 %1195, %v1147
        %v1197 = vpop.permute.xlu0 %1196
        %1200 = vset.pattern.permute.xlu0 0
        %1201 = vperm.xlu0 %1200, %v1150
        %v1202 = vpop.permute.xlu0 %1201
        %1205 = vset.pattern.permute.xlu0 0
        %1206 = vperm.xlu0 %1205, %v1152
        %v1207 = vpop.permute.xlu0 %1206
        %1210 = vset.pattern.permute.xlu0 0
        %1211 = vperm.xlu0 %1210, %v1155
        %v1212 = vpop.permute.xlu0 %1211
        %1215 = vset.pattern.permute.xlu0 0
        %1216 = vperm.xlu0 %1215, %v1157
        %v1217 = vpop.permute.xlu0 %1216
        %1220 = vset.pattern.permute.xlu0 0
        %1221 = vperm.xlu0 %1220, %v1160
        %v1222 = vpop.permute.xlu0 %1221
        %1225 = vset.pattern.permute.xlu0 0
        %1226 = vperm.xlu0 %1225, %v1162
        %v1227 = vpop.permute.xlu0 %1226
        %1230 = vset.pattern.permute.xlu0 0
        %1231 = vperm.xlu0 %1230, %v1165
        %v1232 = vpop.permute.xlu0 %1231
        %1235 = vset.pattern.permute.xlu0 0
        %1236 = vperm.xlu0 %1235, %v1167
        %v1237 = vpop.permute.xlu0 %1236
        %1240 = vset.pattern.permute.xlu0 0
        %1241 = vperm.xlu0 %1240, %v1170
        %v1242 = vpop.permute.xlu0 %1241
        %1245 = vset.pattern.permute.xlu0 0
        %1246 = vperm.xlu0 %1245, %v1172
        %v1247 = vpop.permute.xlu0 %1246
        %1250 = vset.pattern.permute.xlu0 0
        %1251 = vperm.xlu0 %1250, %v1175
        %v1252 = vpop.permute.xlu0 %1251
        %1255 = vset.pattern.permute.xlu0 0
        %1256 = vperm.xlu0 %1255, %v1177
        %v1257 = vpop.permute.xlu0 %1256
        %v1260 = vsel %vm850, %v1114, 0
        %v1263 = vsel %vm850, %v1115, 0
        %v1266 = vsel %vm850, %v1116, 0
        %v1269 = vsel %vm850, %v1117, 0
        %v1272 = vsel %vm850, %v1118, 0
        %v1275 = vsel %vm850, %v1119, 0
        %v1278 = vsel %vm850, %v1120, 0
        %v1281 = vsel %vm850, %v1121, 0
        %v1284 = vsel %vm850, %v1025, 0
        %v1287 = vsel %vm850, %v1026, 0
        %v1290 = vsel %vm850, %v1027, 0
        %v1293 = vsel %vm850, %v1028, 0
        %v1296 = vsel %vm850, %v1029, 0
        %v1299 = vsel %vm850, %v1030, 0
        %v1302 = vsel %vm850, %v1031, 0
        %v1305 = vsel %vm850, %v1032, 0
        %1307 = vmatpush.bf16.xpose.msra.mxu0 %v1305
        %1308 = vmatpush.bf16.xpose.msra.mxu0 %v1302
        %1309 = vmatpush.bf16.xpose.msra.mxu0 %v1299
        %1310 = vmatpush.bf16.xpose.msra.mxu0 %v1296
        %1311 = vmatpush.bf16.xpose.msra.mxu0 %v1293
        %1312 = vmatpush.bf16.xpose.msra.mxu0 %v1290
        %1313 = vmatpush.bf16.xpose.msra.mxu0 %v1287
        %1314 = vmatpush.bf16.xpose.msra.mxu0 %v1284
        %1315 = vmatmul.bf16.gmra.mxu0 %v1260
        %v1316 = vpop.f32.mrf.mxu0
        %v1317 = vadd.f32 %v1182, %v1316
        %v1318 = vpop.f32.mrf.mxu0
        %v1319 = vadd.f32 %v1187, %v1318
        %1320 = vmatmul.bf16.gmra.mxu0 %v1263
        %v1321 = vpop.f32.mrf.mxu0
        %v1322 = vadd.f32 %v1192, %v1321
        %v1323 = vpop.f32.mrf.mxu0
        %v1324 = vadd.f32 %v1197, %v1323
        %1325 = vmatmul.bf16.gmra.mxu0 %v1266
        %v1326 = vpop.f32.mrf.mxu0
        %v1327 = vadd.f32 %v1202, %v1326
        %v1328 = vpop.f32.mrf.mxu0
        %v1329 = vadd.f32 %v1207, %v1328
        %1330 = vmatmul.bf16.gmra.mxu0 %v1269
        %v1331 = vpop.f32.mrf.mxu0
        %v1332 = vadd.f32 %v1212, %v1331
        %v1333 = vpop.f32.mrf.mxu0
        %v1334 = vadd.f32 %v1217, %v1333
        %1335 = vmatmul.bf16.gmra.mxu0 %v1272
        %v1336 = vpop.f32.mrf.mxu0
        %v1337 = vadd.f32 %v1222, %v1336
        %v1338 = vpop.f32.mrf.mxu0
        %v1339 = vadd.f32 %v1227, %v1338
        %1340 = vmatmul.bf16.gmra.mxu0 %v1275
        %v1341 = vpop.f32.mrf.mxu0
        %v1342 = vadd.f32 %v1232, %v1341
        %v1343 = vpop.f32.mrf.mxu0
        %v1344 = vadd.f32 %v1237, %v1343
        %1345 = vmatmul.bf16.gmra.mxu0 %v1278
        %v1346 = vpop.f32.mrf.mxu0
        %v1347 = vadd.f32 %v1242, %v1346
        %v1348 = vpop.f32.mrf.mxu0
        %v1349 = vadd.f32 %v1247, %v1348
        %1350 = vmatmul.bf16.gmra.mxu0 %v1281
        %v1351 = vpop.f32.mrf.mxu0
        %v1352 = vadd.f32 %v1252, %v1351
        %v1353 = vpop.f32.mrf.mxu0
        %v1354 = vadd.f32 %v1257, %v1353
        %1355 = vdwg.mxu0
        %1356 = vst [vmem:[%s581] sm:$0xff] %v1317
        %1357 = vst [vmem:[%s581 + $0x8] sm:$0xff] %v1319
        %1358 = vst [vmem:[%s581 + $0x10] sm:$0xff] %v1322
        %1359 = vst [vmem:[%s581 + $0x18] sm:$0xff] %v1324
        %1360 = vst [vmem:[%s581 + $0x20] sm:$0xff] %v1327
        %1361 = vst [vmem:[%s581 + $0x28] sm:$0xff] %v1329
        %1362 = vst [vmem:[%s581 + $0x30] sm:$0xff] %v1332
        %1363 = vst [vmem:[%s581 + $0x38] sm:$0xff] %v1334
        %1364 = vst [vmem:[%s581 + $0x40] sm:$0xff] %v1337
        %1365 = vst [vmem:[%s581 + $0x48] sm:$0xff] %v1339
        %1366 = vst [vmem:[%s581 + $0x50] sm:$0xff] %v1342
        %1367 = vst [vmem:[%s581 + $0x58] sm:$0xff] %v1344
        %1368 = vst [vmem:[%s581 + $0x60] sm:$0xff] %v1347
        %1369 = vst [vmem:[%s581 + $0x68] sm:$0xff] %v1349
        %1370 = vst [vmem:[%s581 + $0x70] sm:$0xff] %v1352
        %1371 = vst [vmem:[%s581 + $0x78] sm:$0xff] %v1354
        %v1372 = vld [vmem:[%s11] sm:$0xf]
        %v1373 = vld [vmem:[%s12] sm:$0x1]
        %v1375 = vperm.slane %v1373, 0
        %v1378 = vsel %vm875, %v1372, 0
        %1380 = vmatpush.bf16.msra.mxu0 0
        %1381 = vmatpush.bf16.msra.mxu0 0
        %1382 = vmatpush.bf16.msra.mxu0 0
        %1383 = vmatpush.bf16.msra.mxu0 0
        %1384 = vmatpush.bf16.msra.mxu0 0
        %1385 = vmatpush.bf16.msra.mxu0 0
        %1386 = vmatpush.bf16.msra.mxu0 0
        %1387 = vmatpush.bf16.msra.mxu0 %v1378
        %1388 = vmatmul.bf16.gmra.mxu0 %v852
        %v1389 = vpop.f32.mrf.mxu0
        %v1390 = vadd.f32 %v1375, %v1389
        %v1391 = vpop.f32.mrf.mxu0
        %v1392 = vadd.f32 %v1375, %v1391
        %1393 = vmatmul.bf16.gmra.mxu0 %v855
        %v1394 = vpop.f32.mrf.mxu0
        %v1395 = vadd.f32 %v1375, %v1394
        %v1396 = vpop.f32.mrf.mxu0
        %v1397 = vadd.f32 %v1375, %v1396
        %1398 = vmatmul.bf16.gmra.mxu0 %v858
        %v1399 = vpop.f32.mrf.mxu0
        %v1400 = vadd.f32 %v1375, %v1399
        %v1401 = vpop.f32.mrf.mxu0
        %v1402 = vadd.f32 %v1375, %v1401
        %1403 = vmatmul.bf16.gmra.mxu0 %v861
        %v1404 = vpop.f32.mrf.mxu0
        %v1405 = vadd.f32 %v1375, %v1404
        %v1406 = vpop.f32.mrf.mxu0
        %v1407 = vadd.f32 %v1375, %v1406
        %1408 = vmatmul.bf16.gmra.mxu0 %v864
        %v1409 = vpop.f32.mrf.mxu0
        %v1410 = vadd.f32 %v1375, %v1409
        %v1411 = vpop.f32.mrf.mxu0
        %v1412 = vadd.f32 %v1375, %v1411
        %1413 = vmatmul.bf16.gmra.mxu0 %v867
        %v1414 = vpop.f32.mrf.mxu0
        %v1415 = vadd.f32 %v1375, %v1414
        %v1416 = vpop.f32.mrf.mxu0
        %v1417 = vadd.f32 %v1375, %v1416
        %1418 = vmatmul.bf16.gmra.mxu0 %v870
        %v1419 = vpop.f32.mrf.mxu0
        %v1420 = vadd.f32 %v1375, %v1419
        %v1421 = vpop.f32.mrf.mxu0
        %v1422 = vadd.f32 %v1375, %v1421
        %1423 = vmatmul.bf16.gmra.mxu0 %v873
        %v1424 = vpop.f32.mrf.mxu0
        %v1425 = vadd.f32 %v1375, %v1424
        %v1426 = vpop.f32.mrf.mxu0
        %v1427 = vadd.f32 %v1375, %v1426
        %1428 = vdwg.mxu0
        %v1429 = vmax.f32 %v1390, 0.0
        %v1430 = vmax.f32 %v1392, 0.0
        %v1431 = vmax.f32 %v1395, 0.0
        %v1432 = vmax.f32 %v1397, 0.0
        %v1433 = vmax.f32 %v1400, 0.0
        %v1434 = vmax.f32 %v1402, 0.0
        %v1435 = vmax.f32 %v1405, 0.0
        %v1436 = vmax.f32 %v1407, 0.0
        %v1437 = vmax.f32 %v1410, 0.0
        %v1438 = vmax.f32 %v1412, 0.0
        %v1439 = vmax.f32 %v1415, 0.0
        %v1440 = vmax.f32 %v1417, 0.0
        %v1441 = vmax.f32 %v1420, 0.0
        %v1442 = vmax.f32 %v1422, 0.0
        %v1443 = vmax.f32 %v1425, 0.0
        %v1444 = vmax.f32 %v1427, 0.0
        %v1445 = vpack.c.bf16 %v1429, %v1429
        %v1446 = vpack.c.bf16 %v1430, %v1430
        %v1447 = vpack.c.bf16 %v1431, %v1431
        %v1448 = vpack.c.bf16 %v1432, %v1432
        %v1449 = vpack.c.bf16 %v1433, %v1433
        %v1450 = vpack.c.bf16 %v1434, %v1434
        %v1451 = vpack.c.bf16 %v1435, %v1435
        %v1452 = vpack.c.bf16 %v1436, %v1436
        %v1453 = vpack.c.bf16 %v1437, %v1437
        %v1454 = vpack.c.bf16 %v1438, %v1438
        %v1455 = vpack.c.bf16 %v1439, %v1439
        %v1456 = vpack.c.bf16 %v1440, %v1440
        %v1457 = vpack.c.bf16 %v1441, %v1441
        %v1458 = vpack.c.bf16 %v1442, %v1442
        %v1459 = vpack.c.bf16 %v1443, %v1443
        %v1460 = vpack.c.bf16 %v1444, %v1444
        %vm1461 = vcmask 60416
        %1462 = vst.msk [vmem:[%s605] sm:$0xf] %vm1461, %v1445
        %1463 = vst.msk [vmem:[%s605 + $0x4] sm:$0xf] %vm1461, %v1446
        %1464 = vst.msk [vmem:[%s605 + $0x8] sm:$0xf] %vm1461, %v1447
        %1465 = vst.msk [vmem:[%s605 + $0xc] sm:$0xf] %vm1461, %v1448
        %1466 = vst.msk [vmem:[%s605 + $0x10] sm:$0xf] %vm1461, %v1449
        %1467 = vst.msk [vmem:[%s605 + $0x14] sm:$0xf] %vm1461, %v1450
        %1468 = vst.msk [vmem:[%s605 + $0x18] sm:$0xf] %vm1461, %v1451
        %1469 = vst.msk [vmem:[%s605 + $0x1c] sm:$0xf] %vm1461, %v1452
        %1470 = vst.msk [vmem:[%s605 + $0x20] sm:$0xf] %vm1461, %v1453
        %1471 = vst.msk [vmem:[%s605 + $0x24] sm:$0xf] %vm1461, %v1454
        %1472 = vst.msk [vmem:[%s605 + $0x28] sm:$0xf] %vm1461, %v1455
        %1473 = vst.msk [vmem:[%s605 + $0x2c] sm:$0xf] %vm1461, %v1456
        %1474 = vst.msk [vmem:[%s605 + $0x30] sm:$0xf] %vm1461, %v1457
        %1475 = vst.msk [vmem:[%s605 + $0x34] sm:$0xf] %vm1461, %v1458
        %1476 = vst.msk [vmem:[%s605 + $0x38] sm:$0xf] %vm1461, %v1459
        %1477 = vst.msk [vmem:[%s605 + $0x3c] sm:$0xf] %vm1461, %v1460
        %v1478 = vld [vmem:[%s13] sm:$0xf]
        %v1479 = vld [vmem:[%s14] sm:$0x1]
        %v1481 = vperm.slane %v1479, 0
        %v1484 = vsel %vm875, %v1478, 0
        %1486 = vmatpush.bf16.msra.mxu0 0
        %1487 = vmatpush.bf16.msra.mxu0 0
        %1488 = vmatpush.bf16.msra.mxu0 0
        %1489 = vmatpush.bf16.msra.mxu0 0
        %1490 = vmatpush.bf16.msra.mxu0 0
        %1491 = vmatpush.bf16.msra.mxu0 0
        %1492 = vmatpush.bf16.msra.mxu0 0
        %1493 = vmatpush.bf16.msra.mxu0 %v1484
        %1494 = vmatmul.bf16.gmra.mxu0 %v852
        %v1495 = vpop.f32.mrf.mxu0
        %v1496 = vadd.f32 %v1481, %v1495
        %v1497 = vpop.f32.mrf.mxu0
        %v1498 = vadd.f32 %v1481, %v1497
        %1499 = vmatmul.bf16.gmra.mxu0 %v855
        %v1500 = vpop.f32.mrf.mxu0
        %v1501 = vadd.f32 %v1481, %v1500
        %v1502 = vpop.f32.mrf.mxu0
        %v1503 = vadd.f32 %v1481, %v1502
        %1504 = vmatmul.bf16.gmra.mxu0 %v858
        %v1505 = vpop.f32.mrf.mxu0
        %v1506 = vadd.f32 %v1481, %v1505
        %v1507 = vpop.f32.mrf.mxu0
        %v1508 = vadd.f32 %v1481, %v1507
        %1509 = vmatmul.bf16.gmra.mxu0 %v861
        %v1510 = vpop.f32.mrf.mxu0
        %v1511 = vadd.f32 %v1481, %v1510
        %v1512 = vpop.f32.mrf.mxu0
        %v1513 = vadd.f32 %v1481, %v1512
        %1514 = vmatmul.bf16.gmra.mxu0 %v864
        %v1515 = vpop.f32.mrf.mxu0
        %v1516 = vadd.f32 %v1481, %v1515
        %v1517 = vpop.f32.mrf.mxu0
        %v1518 = vadd.f32 %v1481, %v1517
        %1519 = vmatmul.bf16.gmra.mxu0 %v867
        %v1520 = vpop.f32.mrf.mxu0
        %v1521 = vadd.f32 %v1481, %v1520
        %v1522 = vpop.f32.mrf.mxu0
        %v1523 = vadd.f32 %v1481, %v1522
        %1524 = vmatmul.bf16.gmra.mxu0 %v870
        %v1525 = vpop.f32.mrf.mxu0
        %v1526 = vadd.f32 %v1481, %v1525
        %v1527 = vpop.f32.mrf.mxu0
        %v1528 = vadd.f32 %v1481, %v1527
        %1529 = vmatmul.bf16.gmra.mxu0 %v873
        %v1530 = vpop.f32.mrf.mxu0
        %v1531 = vadd.f32 %v1481, %v1530
        %v1532 = vpop.f32.mrf.mxu0
        %v1533 = vadd.f32 %v1481, %v1532
        %1534 = vdwg.mxu0
        %v1535 = vmax.f32 %v1496, 0.0
        %v1536 = vmax.f32 %v1498, 0.0
        %v1537 = vmax.f32 %v1501, 0.0
        %v1538 = vmax.f32 %v1503, 0.0
        %v1539 = vmax.f32 %v1506, 0.0
        %v1540 = vmax.f32 %v1508, 0.0
        %v1541 = vmax.f32 %v1511, 0.0
        %v1542 = vmax.f32 %v1513, 0.0
        %v1543 = vmax.f32 %v1516, 0.0
        %v1544 = vmax.f32 %v1518, 0.0
        %v1545 = vmax.f32 %v1521, 0.0
        %v1546 = vmax.f32 %v1523, 0.0
        %v1547 = vmax.f32 %v1526, 0.0
        %v1548 = vmax.f32 %v1528, 0.0
        %v1549 = vmax.f32 %v1531, 0.0
        %v1550 = vmax.f32 %v1533, 0.0
        %v1551 = vpack.c.bf16 %v1535, %v1535
        %v1552 = vpack.c.bf16 %v1536, %v1536
        %v1553 = vpack.c.bf16 %v1537, %v1537
        %v1554 = vpack.c.bf16 %v1538, %v1538
        %v1555 = vpack.c.bf16 %v1539, %v1539
        %v1556 = vpack.c.bf16 %v1540, %v1540
        %v1557 = vpack.c.bf16 %v1541, %v1541
        %v1558 = vpack.c.bf16 %v1542, %v1542
        %v1559 = vpack.c.bf16 %v1543, %v1543
        %v1560 = vpack.c.bf16 %v1544, %v1544
        %v1561 = vpack.c.bf16 %v1545, %v1545
        %v1562 = vpack.c.bf16 %v1546, %v1546
        %v1563 = vpack.c.bf16 %v1547, %v1547
        %v1564 = vpack.c.bf16 %v1548, %v1548
        %v1565 = vpack.c.bf16 %v1549, %v1549
        %v1566 = vpack.c.bf16 %v1550, %v1550
        %1567 = vst.msk [vmem:[%s610] sm:$0xf] %vm1461, %v1551
        %1568 = vst.msk [vmem:[%s610 + $0x4] sm:$0xf] %vm1461, %v1552
        %1569 = vst.msk [vmem:[%s610 + $0x8] sm:$0xf] %vm1461, %v1553
        %1570 = vst.msk [vmem:[%s610 + $0xc] sm:$0xf] %vm1461, %v1554
        %1571 = vst.msk [vmem:[%s610 + $0x10] sm:$0xf] %vm1461, %v1555
        %1572 = vst.msk [vmem:[%s610 + $0x14] sm:$0xf] %vm1461, %v1556
        %1573 = vst.msk [vmem:[%s610 + $0x18] sm:$0xf] %vm1461, %v1557
        %1574 = vst.msk [vmem:[%s610 + $0x1c] sm:$0xf] %vm1461, %v1558
        %1575 = vst.msk [vmem:[%s610 + $0x20] sm:$0xf] %vm1461, %v1559
        %1576 = vst.msk [vmem:[%s610 + $0x24] sm:$0xf] %vm1461, %v1560
        %1577 = vst.msk [vmem:[%s610 + $0x28] sm:$0xf] %vm1461, %v1561
        %1578 = vst.msk [vmem:[%s610 + $0x2c] sm:$0xf] %vm1461, %v1562
        %1579 = vst.msk [vmem:[%s610 + $0x30] sm:$0xf] %vm1461, %v1563
        %1580 = vst.msk [vmem:[%s610 + $0x34] sm:$0xf] %vm1461, %v1564
        %1581 = vst.msk [vmem:[%s610 + $0x38] sm:$0xf] %vm1461, %v1565
        %1582 = vst.msk [vmem:[%s610 + $0x3c] sm:$0xf] %vm1461, %v1566
        %s1583 = sand.u32 %s366, 1
        %s1584 = scalar_lea.sflag [#allocation4], %s1583
        %s1585 = sand.u32 %s366, 1
        %s1586 = smul.addr %s1585, 128
        %s1587 = scalar_lea.vmem [#allocation3], %s1586
        %s1588 = sand.u32 %s392, 1
        %s1589 = scalar_lea.sflag [#allocation6], %s1588
        %s1590 = sand.u32 %s392, 1
        %s1591 = smul.addr %s1590, 128
        %s1592 = scalar_lea.vmem [#allocation5], %s1591
        %p1593 = scmp.lt.s32.totalorder %s38, 1
        %s1594 = scalar_select %p1593, %s38, 1
        %s1595 = smul.addr %s1594, 16
        %s1596 = smul.addr %s1595, 4
        %s1597 = scalar_lea.vmem %s17, %s1596
        %p1598 = scmp.lt.s32.totalorder %s38, 1
        %s1599 = scalar_select %p1598, %s38, 1
        %s1600 = smul.addr %s1599, 16
        %s1601 = smul.addr %s1600, 4
        %s1602 = scalar_lea.vmem %s18, %s1601
        // Predicated region
        $region81: #{tpu_custom_call.1} parent=79 // pred_check
          %p1603 = pneg %p376
        $region82: #{tpu_custom_call.1} parent=79 // pred_check_branch
          %1605 = sbr.rel (%p1603) target = $region84
        $region83: #{tpu_custom_call.1} parent=79 // pred_region
          %1607 = vsyncadd %s1584, 0
          %s1608 = smul.addr %s38, 16
          %s1609 = smul.addr %s1608, 8
          %s1610 = scalar_lea.hbm %s15, %s1609
          %s1611 = sshll.u32 %s1587, 4
          %s1612 = int_to_ptr.vmem [resolvable:$true] %s1611
          %s1613 = sshll.u32 %s1610, 4
          %s1614 = int_to_ptr.hbm [resolvable:$true] %s1613
          %1619 = dma.vmem_to_hbm [thread:$0]  %s1612, 2048, %s1614, %s1584, 128, 128, 8
        $region84: #{tpu_custom_call.1} parent=79 // pred_fallthru
          _
        // Predicated region
        $region85: #{tpu_custom_call.1} parent=79 // pred_check
          %p1620 = pneg %p402
        $region86: #{tpu_custom_call.1} parent=79 // pred_check_branch
          %1622 = sbr.rel (%p1620) target = $region88
        $region87: #{tpu_custom_call.1} parent=79 // pred_region
          %1624 = vsyncadd %s1589, 0
          %s1625 = smul.addr %s38, 16
          %s1626 = smul.addr %s1625, 8
          %s1627 = scalar_lea.hbm %s16, %s1626
          %s1628 = sshll.u32 %s1592, 4
          %s1629 = int_to_ptr.vmem [resolvable:$true] %s1628
          %s1630 = sshll.u32 %s1627, 4
          %s1631 = int_to_ptr.hbm [resolvable:$true] %s1630
          %1636 = dma.vmem_to_hbm [thread:$0]  %s1629, 2048, %s1631, %s1589, 128, 128, 8
        $region88: #{tpu_custom_call.1} parent=79 // pred_fallthru
          _
        // Predicated region
        $region89: #{tpu_custom_call.1} parent=79 // pred_check
          %p1637 = pneg %p428
        $region90: #{tpu_custom_call.1} parent=79 // pred_check_branch
          %1639 = sbr.rel (%p1637) target = $region92
        $region91: #{tpu_custom_call.1} parent=79 // pred_region
          _
        $region92: #{tpu_custom_call.1} parent=79 // pred_fallthru
          _
        // Predicated region
        $region93: #{tpu_custom_call.1} parent=79 // pred_check
          %p1640 = pneg %p454
        $region94: #{tpu_custom_call.1} parent=79 // pred_check_branch
          %1642 = sbr.rel (%p1640) target = $region96
        $region95: #{tpu_custom_call.1} parent=79 // pred_region
          _
        $region96: #{tpu_custom_call.1} parent=79 // pred_fallthru
          _
      $region80: #{tpu_custom_call.1} parent=5 // pred_fallthru
        _
      %p1643 = scmp.le.s32.totalorder 2, %s33
      // Predicated region
      $region97: #{tpu_custom_call.1} parent=5 // pred_check
        %p1644 = pneg %p1643
      $region98: #{tpu_custom_call.1} parent=5 // pred_check_branch
        %1646 = sbr.rel (%p1644) target = $region100
      $region99: #{tpu_custom_call.1} parent=5 // pred_region
        %s1647 = ssub.s32 %s33, 2
        // Predicated region
        $region101: #{tpu_custom_call.1} parent=99 // pred_check
          %p1648 = pneg %p382
        $region102: #{tpu_custom_call.1} parent=99 // pred_check_branch
          %1650 = sbr.rel (%p1648) target = $region104
        $region103: #{tpu_custom_call.1} parent=99 // pred_region
          %s1651 = sand.u32 %s367, 1
          %s1652 = scalar_lea.sflag [#allocation4], %s1651
          %s1653 = sand.u32 %s367, 1
          %s1654 = smul.addr %s1653, 128
          %s1655 = scalar_lea.vmem [#allocation3], %s1654
          %1657 = dma.done %s1652, 2048
        $region104: #{tpu_custom_call.1} parent=99 // pred_fallthru
          _
        // Predicated region
        $region105: #{tpu_custom_call.1} parent=99 // pred_check
          %p1658 = pneg %p408
        $region106: #{tpu_custom_call.1} parent=99 // pred_check_branch
          %1660 = sbr.rel (%p1658) target = $region108
        $region107: #{tpu_custom_call.1} parent=99 // pred_region
          %s1661 = sand.u32 %s393, 1
          %s1662 = scalar_lea.sflag [#allocation6], %s1661
          %s1663 = sand.u32 %s393, 1
          %s1664 = smul.addr %s1663, 128
          %s1665 = scalar_lea.vmem [#allocation5], %s1664
          %1667 = dma.done %s1662, 2048
        $region108: #{tpu_custom_call.1} parent=99 // pred_fallthru
          _
        // Predicated region
        $region109: #{tpu_custom_call.1} parent=99 // pred_check
          %p1668 = pneg %p434
        $region110: #{tpu_custom_call.1} parent=99 // pred_check_branch
          %1670 = sbr.rel (%p1668) target = $region112
        $region111: #{tpu_custom_call.1} parent=99 // pred_region
          %p1671 = scmp.lt.s32.totalorder %s39, 1
          %s1672 = scalar_select %p1671, %s39, 1
          %s1673 = smul.addr %s1672, 16
          %s1674 = smul.addr %s1673, 4
          %s1675 = scalar_lea.vmem %s17, %s1674
        $region112: #{tpu_custom_call.1} parent=99 // pred_fallthru
          _
        // Predicated region
        $region113: #{tpu_custom_call.1} parent=99 // pred_check
          %p1676 = pneg %p460
        $region114: #{tpu_custom_call.1} parent=99 // pred_check_branch
          %1678 = sbr.rel (%p1676) target = $region116
        $region115: #{tpu_custom_call.1} parent=99 // pred_region
          %p1679 = scmp.lt.s32.totalorder %s39, 1
          %s1680 = scalar_select %p1679, %s39, 1
          %s1681 = smul.addr %s1680, 16
          %s1682 = smul.addr %s1681, 4
          %s1683 = scalar_lea.vmem %s18, %s1682
        $region116: #{tpu_custom_call.1} parent=99 // pred_fallthru
          _
      $region100: #{tpu_custom_call.1} parent=5 // pred_fallthru
        _
    $region6: #{tpu_custom_call.1} parent=1 // loop_footer
      %s37 = sadd.s32 1, %s33
    $region7: #{tpu_custom_call.1} parent=1 // loop_footer_branch
      %32 = sbr.rel target = $region3
    $region8: #{tpu_custom_call.1} parent=1 // loop_exit
      _
    %1684 = vsyncpa [#allocation4], 1
    %s1685 = scalar_lea.sflag [#allocation4], 1
    %1686 = vsyncpa %s1685, 1
    %1687 = vsyncpa [#allocation6], 1
    %s1688 = scalar_lea.sflag [#allocation6], 1
    %1689 = vsyncpa %s1688, 1

</llo_original>
